<compile_context>
chip_gen: v5e
topology: v5e:2x2
jax: 0.10.0
libtpu: 0.0.40
codegen_flags: <defaults>
</compile_context>

<pallas_src>
import jax
import jax.numpy as jnp
from jax.experimental import pallas as pl
from jax.experimental.pallas import tpu as pltpu

# Layer sizes fixed by the module definition.
DIMS = [784, 512, 256, 128, 32, 10]
IN_DIM = DIMS[0]            # 784 -- NOT padded; full-dim last-axis blocks are legal
H4_PAD = 128                # l4 hidden 32  -> 128 lane-dense
OUT_PAD = 128               # logits   10  -> 128 lane-dense (sliced back in wrapper)
DEFAULT_TB = 512            # batch tile (sweep 256 / 512 / 1024)
VMEM_LIMIT_BYTES = 32 * 1024 * 1024  # explicit scoped-VMEM limit (v5e default is 16 MiB)


def _round_up(n, m):
    return (n + m - 1) // m * m


def _batch_tiling(batch, tb):
    """Balanced batch tiling.

    Returns (b_tile, n_tiles) with b_tile a multiple of 8, n_tiles * b_tile >= batch,
    (n_tiles - 1) * b_tile < batch (standard partial-last-block case), and n_tiles >= 2
    whenever the batch is big enough so both v7x TensorCores get work.
    """
    n_tiles = -(-batch // tb)
    if n_tiles == 1 and batch >= 16:
        n_tiles = 2
    b_tile = _round_up(-(-batch // n_tiles), 8)
    while n_tiles > 1 and (n_tiles - 1) * b_tile >= batch:
        n_tiles -= 1
        b_tile = _round_up(-(-batch // n_tiles), 8)
    return b_tile, n_tiles


def mlp_kernel(x_ref,
               w1_ref, b1_ref,
               w2_ref, b2_ref,
               w3_ref, b3_ref,
               w4_ref, b4_ref,
               w5_ref, b5_ref,
               o_ref):
    """One batch tile of the 5-layer MLP, fully VMEM-resident.

    bf16 MXU matmuls with f32 accumulation; bias add / ReLU / casts in f32 on the VPU.
    All layer widths are >= 128 lanes so there are no masked partial stores.
    """
    def layer(h_bf16, w_ref, b_ref):
        acc = jnp.dot(h_bf16, w_ref[...], preferred_element_type=jnp.float32)
        return jnp.maximum(acc + b_ref[...], 0.0)

    # In-kernel f32 -> bf16 cast of x (rides in the VPU slot, hides under the DMA);
    # avoids a separate wrapper-side convert pass over the whole batch in HBM.
    h = x_ref[...].astype(jnp.bfloat16)                        # (TB, 784)
    h = layer(h, w1_ref, b1_ref).astype(jnp.bfloat16)          # (TB, 512)
    h = layer(h, w2_ref, b2_ref).astype(jnp.bfloat16)          # (TB, 256)
    h = layer(h, w3_ref, b3_ref).astype(jnp.bfloat16)          # (TB, 128)
    h = layer(h, w4_ref, b4_ref).astype(jnp.bfloat16)          # (TB, 128) (cols 32.. are 0)
    out = jnp.dot(h, w5_ref[...], preferred_element_type=jnp.float32) + b5_ref[...]
    o_ref[...] = out.astype(o_ref.dtype)                       # (TB, 128)


def init_params(key):
    """PyTorch-Linear-style init U(-1/sqrt(fan_in), 1/sqrt(fan_in)).

    Returns raw f32 weights already transposed to (in, out) plus (1, out) biases.
    """
    params = []
    for i in range(len(DIMS) - 1):
        fan_in, fan_out = DIMS[i], DIMS[i + 1]
        key, kw, kb = jax.random.split(key, 3)
        bound = 1.0 / (fan_in ** 0.5)
        w = jax.random.uniform(kw, (fan_in, fan_out), jnp.float32, -bound, bound)
        b = jax.random.uniform(kb, (1, fan_out), jnp.float32, -bound, bound)
        params.append((w, b))
    return params


def pack_params(params):
    """Pad + cast raw f32 params into the kernel layout (bf16 weights, f32 biases)."""
    (w1, b1), (w2, b2), (w3, b3), (w4, b4), (w5, b5) = params

    w1p = w1.astype(jnp.bfloat16)                                            # (784, 512)
    w2p = w2.astype(jnp.bfloat16)                                            # (512, 256)
    w3p = w3.astype(jnp.bfloat16)                                            # (256, 128)
    w4p = jnp.pad(w4, ((0, 0), (0, H4_PAD - DIMS[4]))).astype(jnp.bfloat16)  # (128, 128)
    w5p = jnp.pad(w5, ((0, H4_PAD - DIMS[4]),
                       (0, OUT_PAD - DIMS[5]))).astype(jnp.bfloat16)         # (128, 128)

    b1p = b1.astype(jnp.float32)
    b2p = b2.astype(jnp.float32)
    b3p = b3.astype(jnp.float32)
    b4p = jnp.pad(b4, ((0, 0), (0, H4_PAD - DIMS[4]))).astype(jnp.float32)   # (1, 128)
    b5p = jnp.pad(b5, ((0, 0), (0, OUT_PAD - DIMS[5]))).astype(jnp.float32)  # (1, 128)

    return [(w1p, b1p), (w2p, b2p), (w3p, b3p), (w4p, b4p), (w5p, b5p)]


def net_forward(x_nchw, packed_params, *, tb=DEFAULT_TB):
    """Flatten NCHW input and run the batch-gridded Pallas MLP (no extra HBM passes)."""
    batch = x_nchw.shape[0]
    x = x_nchw.reshape(batch, IN_DIM).astype(jnp.float32)   # == x.view(-1, 784), f32

    b_tile, n_tiles = _batch_tiling(batch, tb)
    b_pad = b_tile * n_tiles   # output rows (padding rows, if any, are sliced off)

    flat_args = [x]
    # x: f32, un-padded; block last dim == full array dim (784) is legal.
    in_specs = [pl.BlockSpec((b_tile, IN_DIM), lambda i: (i, 0))]
    for w, b in packed_params:
        flat_args.extend([w, b])
        # Weights/biases: full block, constant index_map -> loaded once and
        # VMEM-resident across all batch-grid steps.
        in_specs.append(pl.BlockSpec(w.shape, lambda i: (0, 0)))
        in_specs.append(pl.BlockSpec(b.shape, lambda i: (0, 0)))

    out = pl.pallas_call(
        mlp_kernel,
        out_shape=jax.ShapeDtypeStruct((b_pad, OUT_PAD), jnp.float32),
        grid=(n_tiles,),
        in_specs=in_specs,
        out_specs=pl.BlockSpec((b_tile, OUT_PAD), lambda i: (i, 0)),
        compiler_params=pltpu.CompilerParams(
            dimension_semantics=("parallel",),
            vmem_limit_bytes=VMEM_LIMIT_BYTES),
    )(*flat_args)

    # Strip batch padding (ragged tail rows) and the lane padding of the 10-wide logits.
    return out[:batch, :DIMS[-1]]


net_forward_jit = jax.jit(net_forward, static_argnames=("tb",))


def reference_forward(x_nchw, params):
    """Pure-JAX reference mirroring the PyTorch forward with the same bf16 rounding."""
    x = x_nchw.reshape(x_nchw.shape[0], DIMS[0]).astype(jnp.float32)
    for i, (w, b) in enumerate(params):
        x = jnp.dot(x.astype(jnp.bfloat16), w.astype(jnp.bfloat16),
                    preferred_element_type=jnp.float32) + b
        if i < len(params) - 1:
            x = jnp.maximum(x, 0.0)
    return x


if __name__ == "__main__":
    key = jax.random.PRNGKey(0)
    key_x, key_x2, key_p = jax.random.split(key, 3)

    params = init_params(key_p)
    packed = pack_params(params)

    # Small MNIST-like batch: (B=8, C=1, H=28, W=28), NCHW as in PyTorch.
    x = jax.random.normal(key_x, (8, 1, 28, 28), dtype=jnp.float32)
    out = jax.block_until_ready(net_forward_jit(x, packed))
    ref = reference_forward(x, params)
    assert out.shape == (8, 10)
    assert jnp.allclose(out, ref, atol=5e-3, rtol=5e-3), float(jnp.abs(out - ref).max())

    # Second check: ragged batch (20) exercises the multi-tile / partial-last-block path.
    x2 = jax.random.normal(key_x2, (20, 1, 28, 28), dtype=jnp.float32)
    out2 = jax.block_until_ready(net_forward_jit(x2, packed))
    ref2 = reference_forward(x2, params)
    assert out2.shape == (20, 10)
    assert jnp.allclose(out2, ref2, atol=5e-3, rtol=5e-3), float(jnp.abs(out2 - ref2).max())

    print("KERNEL_OK")
</pallas_src>

<mosaic_0001>
module attributes {stable_mosaic.version = 11 : i64} {
  func.func @mlp_kernel(%arg0: i32, %arg1: memref<8x784xf32, #tpu.memory_space<vmem>>, %arg2: memref<784x512xbf16, #tpu.memory_space<vmem>>, %arg3: memref<1x512xf32, #tpu.memory_space<vmem>>, %arg4: memref<512x256xbf16, #tpu.memory_space<vmem>>, %arg5: memref<1x256xf32, #tpu.memory_space<vmem>>, %arg6: memref<256x128xbf16, #tpu.memory_space<vmem>>, %arg7: memref<1x128xf32, #tpu.memory_space<vmem>>, %arg8: memref<128x128xbf16, #tpu.memory_space<vmem>>, %arg9: memref<1x128xf32, #tpu.memory_space<vmem>>, %arg10: memref<128x128xbf16, #tpu.memory_space<vmem>>, %arg11: memref<1x128xf32, #tpu.memory_space<vmem>>, %arg12: memref<8x128xf32, #tpu.memory_space<vmem>>) attributes {dimension_semantics = [#tpu.dimension_semantics<parallel>], iteration_bounds = array<i64: 1>, scalar_prefetch = 0 : i64, scratch_operands = 0 : i64, tpu.core_type = #tpu.core_type<tc>, window_params = [{transform_indices = @transform_0, window_bounds = array<i64: 8, 784>}, {pipeline_mode = #tpu.pipeline_mode<synchronous>, transform_indices = @transform_1, window_bounds = array<i64: 784, 512>}, {pipeline_mode = #tpu.pipeline_mode<synchronous>, transform_indices = @transform_2, window_bounds = array<i64: 1, 512>}, {pipeline_mode = #tpu.pipeline_mode<synchronous>, transform_indices = @transform_3, window_bounds = array<i64: 512, 256>}, {pipeline_mode = #tpu.pipeline_mode<synchronous>, transform_indices = @transform_4, window_bounds = array<i64: 1, 256>}, {pipeline_mode = #tpu.pipeline_mode<synchronous>, transform_indices = @transform_5, window_bounds = array<i64: 256, 128>}, {pipeline_mode = #tpu.pipeline_mode<synchronous>, transform_indices = @transform_6, window_bounds = array<i64: 1, 128>}, {pipeline_mode = #tpu.pipeline_mode<synchronous>, transform_indices = @transform_7, window_bounds = array<i64: 128, 128>}, {pipeline_mode = #tpu.pipeline_mode<synchronous>, transform_indices = @transform_8, window_bounds = array<i64: 1, 128>}, {pipeline_mode = #tpu.pipeline_mode<synchronous>, transform_indices = @transform_9, window_bounds = array<i64: 128, 128>}, {pipeline_mode = #tpu.pipeline_mode<synchronous>, transform_indices = @transform_10, window_bounds = array<i64: 1, 128>}, {transform_indices = @transform_11, window_bounds = array<i64: 8, 128>}]} {
    %c0 = arith.constant 0 : index
    %c0_0 = arith.constant 0 : index
    %0 = vector.load %arg1[%c0, %c0_0] : memref<8x784xf32, #tpu.memory_space<vmem>>, vector<8x784xf32>
    %1 = arith.truncf %0 : vector<8x784xf32> to vector<8x784xbf16>
    %c0_1 = arith.constant 0 : index
    %c0_2 = arith.constant 0 : index
    %2 = vector.load %arg2[%c0_1, %c0_2] : memref<784x512xbf16, #tpu.memory_space<vmem>>, vector<784x512xbf16>
    %cst = arith.constant dense<0.000000e+00> : vector<8x512xf32>
    %3 = tpu.matmul %1, %2, %cst {dimension_numbers = #tpu.dot_dimension_numbers<[1], [0], [0], [1], [0, 0, 1, 1], [], []>} : vector<8x784xbf16>, vector<784x512xbf16>, vector<8x512xf32> -> vector<8x512xf32>
    %c0_3 = arith.constant 0 : index
    %c0_4 = arith.constant 0 : index
    %4 = vector.load %arg3[%c0_3, %c0_4] : memref<1x512xf32, #tpu.memory_space<vmem>>, vector<1x512xf32>
    %5 = vector.broadcast %4 : vector<1x512xf32> to vector<8x512xf32>
    %6 = arith.addf %3, %5 : vector<8x512xf32>
    %cst_5 = arith.constant 0.000000e+00 : f32
    %7 = vector.broadcast %cst_5 : f32 to vector<8x512xf32>
    %8 = arith.maximumf %6, %7 : vector<8x512xf32>
    %9 = arith.truncf %8 : vector<8x512xf32> to vector<8x512xbf16>
    %c0_6 = arith.constant 0 : index
    %c0_7 = arith.constant 0 : index
    %10 = vector.load %arg4[%c0_6, %c0_7] : memref<512x256xbf16, #tpu.memory_space<vmem>>, vector<512x256xbf16>
    %cst_8 = arith.constant dense<0.000000e+00> : vector<8x256xf32>
    %11 = tpu.matmul %9, %10, %cst_8 {dimension_numbers = #tpu.dot_dimension_numbers<[1], [0], [0], [1], [0, 0, 1, 1], [], []>} : vector<8x512xbf16>, vector<512x256xbf16>, vector<8x256xf32> -> vector<8x256xf32>
    %c0_9 = arith.constant 0 : index
    %c0_10 = arith.constant 0 : index
    %12 = vector.load %arg5[%c0_9, %c0_10] : memref<1x256xf32, #tpu.memory_space<vmem>>, vector<1x256xf32>
    %13 = vector.broadcast %12 : vector<1x256xf32> to vector<8x256xf32>
    %14 = arith.addf %11, %13 : vector<8x256xf32>
    %cst_11 = arith.constant 0.000000e+00 : f32
    %15 = vector.broadcast %cst_11 : f32 to vector<8x256xf32>
    %16 = arith.maximumf %14, %15 : vector<8x256xf32>
    %17 = arith.truncf %16 : vector<8x256xf32> to vector<8x256xbf16>
    %c0_12 = arith.constant 0 : index
    %c0_13 = arith.constant 0 : index
    %18 = vector.load %arg6[%c0_12, %c0_13] : memref<256x128xbf16, #tpu.memory_space<vmem>>, vector<256x128xbf16>
    %cst_14 = arith.constant dense<0.000000e+00> : vector<8x128xf32>
    %19 = tpu.matmul %17, %18, %cst_14 {dimension_numbers = #tpu.dot_dimension_numbers<[1], [0], [0], [1], [0, 0, 1, 1], [], []>} : vector<8x256xbf16>, vector<256x128xbf16>, vector<8x128xf32> -> vector<8x128xf32>
    %c0_15 = arith.constant 0 : index
    %c0_16 = arith.constant 0 : index
    %20 = vector.load %arg7[%c0_15, %c0_16] : memref<1x128xf32, #tpu.memory_space<vmem>>, vector<1x128xf32>
    %21 = vector.broadcast %20 : vector<1x128xf32> to vector<8x128xf32>
    %22 = arith.addf %19, %21 : vector<8x128xf32>
    %cst_17 = arith.constant 0.000000e+00 : f32
    %23 = vector.broadcast %cst_17 : f32 to vector<8x128xf32>
    %24 = arith.maximumf %22, %23 : vector<8x128xf32>
    %25 = arith.truncf %24 : vector<8x128xf32> to vector<8x128xbf16>
    %c0_18 = arith.constant 0 : index
    %c0_19 = arith.constant 0 : index
    %26 = vector.load %arg8[%c0_18, %c0_19] : memref<128x128xbf16, #tpu.memory_space<vmem>>, vector<128x128xbf16>
    %cst_20 = arith.constant dense<0.000000e+00> : vector<8x128xf32>
    %27 = tpu.matmul %25, %26, %cst_20 {dimension_numbers = #tpu.dot_dimension_numbers<[1], [0], [0], [1], [0, 0, 1, 1], [], []>} : vector<8x128xbf16>, vector<128x128xbf16>, vector<8x128xf32> -> vector<8x128xf32>
    %c0_21 = arith.constant 0 : index
    %c0_22 = arith.constant 0 : index
    %28 = vector.load %arg9[%c0_21, %c0_22] : memref<1x128xf32, #tpu.memory_space<vmem>>, vector<1x128xf32>
    %29 = vector.broadcast %28 : vector<1x128xf32> to vector<8x128xf32>
    %30 = arith.addf %27, %29 : vector<8x128xf32>
    %cst_23 = arith.constant 0.000000e+00 : f32
    %31 = vector.broadcast %cst_23 : f32 to vector<8x128xf32>
    %32 = arith.maximumf %30, %31 : vector<8x128xf32>
    %33 = arith.truncf %32 : vector<8x128xf32> to vector<8x128xbf16>
    %c0_24 = arith.constant 0 : index
    %c0_25 = arith.constant 0 : index
    %34 = vector.load %arg10[%c0_24, %c0_25] : memref<128x128xbf16, #tpu.memory_space<vmem>>, vector<128x128xbf16>
    %cst_26 = arith.constant dense<0.000000e+00> : vector<8x128xf32>
    %35 = tpu.matmul %33, %34, %cst_26 {dimension_numbers = #tpu.dot_dimension_numbers<[1], [0], [0], [1], [0, 0, 1, 1], [], []>} : vector<8x128xbf16>, vector<128x128xbf16>, vector<8x128xf32> -> vector<8x128xf32>
    %c0_27 = arith.constant 0 : index
    %c0_28 = arith.constant 0 : index
    %36 = vector.load %arg11[%c0_27, %c0_28] : memref<1x128xf32, #tpu.memory_space<vmem>>, vector<1x128xf32>
    %37 = vector.broadcast %36 : vector<1x128xf32> to vector<8x128xf32>
    %38 = arith.addf %35, %37 : vector<8x128xf32>
    %c0_29 = arith.constant 0 : index
    %c0_30 = arith.constant 0 : index
    %39 = vector.load %arg12[%c0_29, %c0_30] : memref<8x128xf32, #tpu.memory_space<vmem>>, vector<8x128xf32>
    tpu.vector_store %arg12[%c0_29, %c0_30], %38 {strides = array<i32>} : memref<8x128xf32, #tpu.memory_space<vmem>>, vector<8x128xf32>,
    return
  }
  func.func @transform_0(%arg0: i32) -> (i32, i32) {
    %c0_i32 = arith.constant 0 : i32
    %c0_i32_0 = arith.constant 0 : i32
    return %arg0, %c0_i32 : i32, i32
  }
  func.func @transform_1(%arg0: i32) -> (i32, i32) {
    %c0_i32 = arith.constant 0 : i32
    %c0_i32_0 = arith.constant 0 : i32
    %c0_i32_1 = arith.constant 0 : i32
    return %c0_i32, %c0_i32_0 : i32, i32
  }
  func.func @transform_2(%arg0: i32) -> (i32, i32) {
    %c0_i32 = arith.constant 0 : i32
    %c0_i32_0 = arith.constant 0 : i32
    %c0_i32_1 = arith.constant 0 : i32
    return %c0_i32, %c0_i32_0 : i32, i32
  }
  func.func @transform_3(%arg0: i32) -> (i32, i32) {
    %c0_i32 = arith.constant 0 : i32
    %c0_i32_0 = arith.constant 0 : i32
    %c0_i32_1 = arith.constant 0 : i32
    return %c0_i32, %c0_i32_0 : i32, i32
  }
  func.func @transform_4(%arg0: i32) -> (i32, i32) {
    %c0_i32 = arith.constant 0 : i32
    %c0_i32_0 = arith.constant 0 : i32
    %c0_i32_1 = arith.constant 0 : i32
    return %c0_i32, %c0_i32_0 : i32, i32
  }
  func.func @transform_5(%arg0: i32) -> (i32, i32) {
    %c0_i32 = arith.constant 0 : i32
    %c0_i32_0 = arith.constant 0 : i32
    %c0_i32_1 = arith.constant 0 : i32
    return %c0_i32, %c0_i32_0 : i32, i32
  }
  func.func @transform_6(%arg0: i32) -> (i32, i32) {
    %c0_i32 = arith.constant 0 : i32
    %c0_i32_0 = arith.constant 0 : i32
    %c0_i32_1 = arith.constant 0 : i32
    return %c0_i32, %c0_i32_0 : i32, i32
  }
  func.func @transform_7(%arg0: i32) -> (i32, i32) {
    %c0_i32 = arith.constant 0 : i32
    %c0_i32_0 = arith.constant 0 : i32
    %c0_i32_1 = arith.constant 0 : i32
    return %c0_i32, %c0_i32_0 : i32, i32
  }
  func.func @transform_8(%arg0: i32) -> (i32, i32) {
    %c0_i32 = arith.constant 0 : i32
    %c0_i32_0 = arith.constant 0 : i32
    %c0_i32_1 = arith.constant 0 : i32
    return %c0_i32, %c0_i32_0 : i32, i32
  }
  func.func @transform_9(%arg0: i32) -> (i32, i32) {
    %c0_i32 = arith.constant 0 : i32
    %c0_i32_0 = arith.constant 0 : i32
    %c0_i32_1 = arith.constant 0 : i32
    return %c0_i32, %c0_i32_0 : i32, i32
  }
  func.func @transform_10(%arg0: i32) -> (i32, i32) {
    %c0_i32 = arith.constant 0 : i32
    %c0_i32_0 = arith.constant 0 : i32
    %c0_i32_1 = arith.constant 0 : i32
    return %c0_i32, %c0_i32_0 : i32, i32
  }
  func.func @transform_11(%arg0: i32) -> (i32, i32) {
    %c0_i32 = arith.constant 0 : i32
    %c0_i32_0 = arith.constant 0 : i32
    return %arg0, %c0_i32 : i32, i32
  }
}

</mosaic_0001>

<llo_original>
// kernel: net_forward.1
$region0: #{net_forward.1}
  #allocation0 [shape = 'u32[]', space=smem, size = 0x4, offset = 0x4, fixed_abs, tag = 'smem constant byte address 0x4 - core index']
  #allocation1 [shape = 'u32[72,128]{1,0:T(1,128)}', space=vmem, size = 0x9000, scoped, tag = 'internal scratch']
  %s0 = inlined_call_operand.vmem [shape: f32[8,784], index: 0, kind: input, shape index: {}]
  %s1 = inlined_call_operand.hbm [shape: bf16[784,512], index: 1, kind: input, shape index: {}]
  %s2 = inlined_call_operand.vmem [shape: f32[1,512], index: 2, kind: input, shape index: {}]
  %s3 = inlined_call_operand.vmem [shape: bf16[512,256], index: 3, kind: input, shape index: {}]
  %s4 = inlined_call_operand.vmem [shape: f32[1,256], index: 4, kind: input, shape index: {}]
  %s5 = inlined_call_operand.vmem [shape: bf16[256,128], index: 5, kind: input, shape index: {}]
  %s6 = inlined_call_operand.vmem [shape: f32[1,128], index: 6, kind: input, shape index: {}]
  %s7 = inlined_call_operand.vmem [shape: bf16[128,128], index: 7, kind: input, shape index: {}]
  %s8 = inlined_call_operand.vmem [shape: f32[1,128], index: 8, kind: input, shape index: {}]
  %s9 = inlined_call_operand.vmem [shape: bf16[128,128], index: 9, kind: input, shape index: {}]
  %s10 = inlined_call_operand.vmem [shape: f32[1,128], index: 10, kind: input, shape index: {}]
  %s11 = inlined_call_operand.hbm [shape: f32[8,128], index: 11, kind: output, shape index: {}]
  %s12 = sld [smem:[#allocation0]]
  $region58: #{net_forward.1} parent=0
    _
  %s14 = ssub.s32 1, %s12
  %s15 = scalar_select 0, %s14, %s12
  $region1: #{net_forward.1} parent=0
    #allocation2 [shape = 'u8[802816]{0}', space=vmem, size = 0xc4000, scoped, tag = 'input window, operand 1, single buffered']
    #allocation3 [shape = 's32[1]{0}', space=sflag, size = 0x4, scoped, tag = 'scoped memory for net_forward.1']
    #allocation4 [shape = 's32[1]{0}', space=sflag, size = 0x4, scoped, tag = 'scoped memory for net_forward.1']
    #allocation5 [shape = 'u8[4096]{0}', space=vmem, size = 0x1000, scoped, tag = 'output window, operand 0, single buffered']
    %16 = vsyncpa [#allocation3], 0
    %17 = vsyncpa [#allocation4], 0
    // Predicated region
    $region2: #{net_forward.1} parent=1 // pred_check
      _
    $region3: #{net_forward.1} parent=1 // pred_check_branch
      %19 = sbr.rel (0) target = $region5
    $region4: #{net_forward.1} parent=1 // pred_region
      _
    $region5: #{net_forward.1} parent=1 // pred_fallthru
      _
    // Predicated region
    $region6: #{net_forward.1} parent=1 // pred_check
      _
    $region7: #{net_forward.1} parent=1 // pred_check_branch
      %21 = sbr.rel (0) target = $region9
    $region8: #{net_forward.1} parent=1 // pred_region
      %23 = vsyncadd [#allocation3], 0
      %s24 = sshll.u32 %s1, 4
      %s25 = int_to_ptr.hbm [resolvable:$true] %s24
      %s26 = sshll.u32 [#allocation2], 4
      %s27 = int_to_ptr.vmem [resolvable:$true] %s26
      %32 = dma.hbm_to_vmem [thread:$0]  %s25, 25088, %s27, [#allocation3], 256, 256, 16
    $region9: #{net_forward.1} parent=1 // pred_fallthru
      _
    // Predicated region
    $region10: #{net_forward.1} parent=1 // pred_check
      _
    $region11: #{net_forward.1} parent=1 // pred_check_branch
      %34 = sbr.rel (0) target = $region13
    $region12: #{net_forward.1} parent=1 // pred_region
      _
    $region13: #{net_forward.1} parent=1 // pred_fallthru
      _
    // Predicated region
    $region14: #{net_forward.1} parent=1 // pred_check
      _
    $region15: #{net_forward.1} parent=1 // pred_check_branch
      %36 = sbr.rel (0) target = $region17
    $region16: #{net_forward.1} parent=1 // pred_region
      _
    $region17: #{net_forward.1} parent=1 // pred_fallthru
      _
    // Predicated region
    $region18: #{net_forward.1} parent=1 // pred_check
      _
    $region19: #{net_forward.1} parent=1 // pred_check_branch
      %38 = sbr.rel (0) target = $region21
    $region20: #{net_forward.1} parent=1 // pred_region
      _
    $region21: #{net_forward.1} parent=1 // pred_fallthru
      _
    // Predicated region
    $region22: #{net_forward.1} parent=1 // pred_check
      _
    $region23: #{net_forward.1} parent=1 // pred_check_branch
      %40 = sbr.rel (0) target = $region25
    $region24: #{net_forward.1} parent=1 // pred_region
      _
    $region25: #{net_forward.1} parent=1 // pred_fallthru
      _
    // Predicated region
    $region26: #{net_forward.1} parent=1 // pred_check
      _
    $region27: #{net_forward.1} parent=1 // pred_check_branch
      %42 = sbr.rel (0) target = $region29
    $region28: #{net_forward.1} parent=1 // pred_region
      _
    $region29: #{net_forward.1} parent=1 // pred_fallthru
      _
    // Predicated region
    $region30: #{net_forward.1} parent=1 // pred_check
      _
    $region31: #{net_forward.1} parent=1 // pred_check_branch
      %44 = sbr.rel (0) target = $region33
    $region32: #{net_forward.1} parent=1 // pred_region
      _
    $region33: #{net_forward.1} parent=1 // pred_fallthru
      _
    // Predicated region
    $region34: #{net_forward.1} parent=1 // pred_check
      _
    $region35: #{net_forward.1} parent=1 // pred_check_branch
      %46 = sbr.rel (0) target = $region37
    $region36: #{net_forward.1} parent=1 // pred_region
      _
    $region37: #{net_forward.1} parent=1 // pred_fallthru
      _
    // Predicated region
    $region38: #{net_forward.1} parent=1 // pred_check
      _
    $region39: #{net_forward.1} parent=1 // pred_check_branch
      %48 = sbr.rel (0) target = $region41
    $region40: #{net_forward.1} parent=1 // pred_region
      _
    $region41: #{net_forward.1} parent=1 // pred_fallthru
      _
    // Predicated region
    $region42: #{net_forward.1} parent=1 // pred_check
      _
    $region43: #{net_forward.1} parent=1 // pred_check_branch
      %50 = sbr.rel (0) target = $region45
    $region44: #{net_forward.1} parent=1 // pred_region
      _
    $region45: #{net_forward.1} parent=1 // pred_fallthru
      _
    // Predicated region
    $region46: #{net_forward.1} parent=1 // pred_check
      _
    $region47: #{net_forward.1} parent=1 // pred_check_branch
      %52 = sbr.rel (0) target = $region49
    $region48: #{net_forward.1} parent=1 // pred_region
      %54 = dma.done [#allocation3], 25088
    $region49: #{net_forward.1} parent=1 // pred_fallthru
      _
    %v56 = vld [vmem:[%s0] sm:$0xff]
    %v57 = vld [vmem:[%s0 + $0x8] sm:$0xff]
    %v58 = vld [vmem:[%s0 + $0x10] sm:$0xff]
    %v59 = vld [vmem:[%s0 + $0x18] sm:$0xff]
    %v60 = vld [vmem:[%s0 + $0x20] sm:$0xff]
    %v61 = vld [vmem:[%s0 + $0x28] sm:$0xff]
    %v62 = vld [vmem:[%s0 + $0x30] sm:$0xff]
    %v63 = vpack.c.bf16 %v56, %v56
    %v64 = vpack.c.bf16 %v57, %v57
    %v65 = vpack.c.bf16 %v58, %v58
    %v66 = vpack.c.bf16 %v59, %v59
    %v67 = vpack.c.bf16 %v60, %v60
    %v68 = vpack.c.bf16 %v61, %v61
    %v69 = vpack.c.bf16 %v62, %v62
    %v70 = vld [vmem:[#allocation2] sm:$0xff]
    %v71 = vld [vmem:[#allocation2 + $0x8] sm:$0xff]
    %v72 = vld [vmem:[#allocation2 + $0x10] sm:$0xff]
    %v73 = vld [vmem:[#allocation2 + $0x18] sm:$0xff]
    %v74 = vld [vmem:[#allocation2 + $0x20] sm:$0xff]
    %v75 = vld [vmem:[#allocation2 + $0x28] sm:$0xff]
    %v76 = vld [vmem:[#allocation2 + $0x30] sm:$0xff]
    %v77 = vld [vmem:[#allocation2 + $0x38] sm:$0xff]
    %v78 = vld [vmem:[#allocation2 + $0x40] sm:$0xff]
    %v79 = vld [vmem:[#allocation2 + $0x48] sm:$0xff]
    %v80 = vld [vmem:[#allocation2 + $0x50] sm:$0xff]
    %v81 = vld [vmem:[#allocation2 + $0x58] sm:$0xff]
    %v82 = vld [vmem:[#allocation2 + $0x60] sm:$0xff]
    %v83 = vld [vmem:[#allocation2 + $0x68] sm:$0xff]
    %v84 = vld [vmem:[#allocation2 + $0x70] sm:$0xff]
    %v85 = vld [vmem:[#allocation2 + $0x78] sm:$0xff]
    %v86 = vld [vmem:[#allocation2 + $0x80] sm:$0xff]
    %v87 = vld [vmem:[#allocation2 + $0x88] sm:$0xff]
    %v88 = vld [vmem:[#allocation2 + $0x90] sm:$0xff]
    %v89 = vld [vmem:[#allocation2 + $0x98] sm:$0xff]
    %v90 = vld [vmem:[#allocation2 + $0xa0] sm:$0xff]
    %v91 = vld [vmem:[#allocation2 + $0xa8] sm:$0xff]
    %v92 = vld [vmem:[#allocation2 + $0xb0] sm:$0xff]
    %v93 = vld [vmem:[#allocation2 + $0xb8] sm:$0xff]
    %v94 = vld [vmem:[#allocation2 + $0xc0] sm:$0xff]
    %v95 = vld [vmem:[#allocation2 + $0xc8] sm:$0xff]
    %v96 = vld [vmem:[#allocation2 + $0xd0] sm:$0xff]
    %v97 = vld [vmem:[#allocation2 + $0xd8] sm:$0xff]
    %v98 = vld [vmem:[#allocation2 + $0xe0] sm:$0xff]
    %v99 = vld [vmem:[#allocation2 + $0xe8] sm:$0xff]
    %v100 = vld [vmem:[#allocation2 + $0xf0] sm:$0xff]
    %v101 = vld [vmem:[#allocation2 + $0xf8] sm:$0xff]
    %v102 = vld [vmem:[#allocation2 + $0x100] sm:$0xff]
    %v103 = vld [vmem:[#allocation2 + $0x108] sm:$0xff]
    %v104 = vld [vmem:[#allocation2 + $0x110] sm:$0xff]
    %v105 = vld [vmem:[#allocation2 + $0x118] sm:$0xff]
    %v106 = vld [vmem:[#allocation2 + $0x120] sm:$0xff]
    %v107 = vld [vmem:[#allocation2 + $0x128] sm:$0xff]
    %v108 = vld [vmem:[#allocation2 + $0x130] sm:$0xff]
    %v109 = vld [vmem:[#allocation2 + $0x138] sm:$0xff]
    %v110 = vld [vmem:[#allocation2 + $0x140] sm:$0xff]
    %v111 = vld [vmem:[#allocation2 + $0x148] sm:$0xff]
    %v112 = vld [vmem:[#allocation2 + $0x150] sm:$0xff]
    %v113 = vld [vmem:[#allocation2 + $0x158] sm:$0xff]
    %v114 = vld [vmem:[#allocation2 + $0x160] sm:$0xff]
    %v115 = vld [vmem:[#allocation2 + $0x168] sm:$0xff]
    %v116 = vld [vmem:[#allocation2 + $0x170] sm:$0xff]
    %v117 = vld [vmem:[#allocation2 + $0x178] sm:$0xff]
    %v118 = vld [vmem:[#allocation2 + $0x180] sm:$0xff]
    %v119 = vld [vmem:[#allocation2 + $0x188] sm:$0xff]
    %v120 = vld [vmem:[#allocation2 + $0x190] sm:$0xff]
    %v121 = vld [vmem:[#allocation2 + $0x198] sm:$0xff]
    %v122 = vld [vmem:[#allocation2 + $0x1a0] sm:$0xff]
    %v123 = vld [vmem:[#allocation2 + $0x1a8] sm:$0xff]
    %v124 = vld [vmem:[#allocation2 + $0x1b0] sm:$0xff]
    %v125 = vld [vmem:[#allocation2 + $0x1b8] sm:$0xff]
    %v126 = vld [vmem:[#allocation2 + $0x1c0] sm:$0xff]
    %v127 = vld [vmem:[#allocation2 + $0x1c8] sm:$0xff]
    %v128 = vld [vmem:[#allocation2 + $0x1d0] sm:$0xff]
    %v129 = vld [vmem:[#allocation2 + $0x1d8] sm:$0xff]
    %v130 = vld [vmem:[#allocation2 + $0x1e0] sm:$0xff]
    %v131 = vld [vmem:[#allocation2 + $0x1e8] sm:$0xff]
    %v132 = vld [vmem:[#allocation2 + $0x1f0] sm:$0xff]
    %v133 = vld [vmem:[#allocation2 + $0x1f8] sm:$0xff]
    %v134 = vld [vmem:[#allocation2 + $0x200] sm:$0xff]
    %v135 = vld [vmem:[#allocation2 + $0x208] sm:$0xff]
    %v136 = vld [vmem:[#allocation2 + $0x210] sm:$0xff]
    %v137 = vld [vmem:[#allocation2 + $0x218] sm:$0xff]
    %v138 = vld [vmem:[#allocation2 + $0x220] sm:$0xff]
    %v139 = vld [vmem:[#allocation2 + $0x228] sm:$0xff]
    %v140 = vld [vmem:[#allocation2 + $0x230] sm:$0xff]
    %v141 = vld [vmem:[#allocation2 + $0x238] sm:$0xff]
    %v142 = vld [vmem:[#allocation2 + $0x240] sm:$0xff]
    %v143 = vld [vmem:[#allocation2 + $0x248] sm:$0xff]
    %v144 = vld [vmem:[#allocation2 + $0x250] sm:$0xff]
    %v145 = vld [vmem:[#allocation2 + $0x258] sm:$0xff]
    %v146 = vld [vmem:[#allocation2 + $0x260] sm:$0xff]
    %v147 = vld [vmem:[#allocation2 + $0x268] sm:$0xff]
    %v148 = vld [vmem:[#allocation2 + $0x270] sm:$0xff]
    %v149 = vld [vmem:[#allocation2 + $0x278] sm:$0xff]
    %v150 = vld [vmem:[#allocation2 + $0x280] sm:$0xff]
    %v151 = vld [vmem:[#allocation2 + $0x288] sm:$0xff]
    %v152 = vld [vmem:[#allocation2 + $0x290] sm:$0xff]
    %v153 = vld [vmem:[#allocation2 + $0x298] sm:$0xff]
    %v154 = vld [vmem:[#allocation2 + $0x2a0] sm:$0xff]
    %v155 = vld [vmem:[#allocation2 + $0x2a8] sm:$0xff]
    %v156 = vld [vmem:[#allocation2 + $0x2b0] sm:$0xff]
    %v157 = vld [vmem:[#allocation2 + $0x2b8] sm:$0xff]
    %v158 = vld [vmem:[#allocation2 + $0x2c0] sm:$0xff]
    %v159 = vld [vmem:[#allocation2 + $0x2c8] sm:$0xff]
    %v160 = vld [vmem:[#allocation2 + $0x2d0] sm:$0xff]
    %v161 = vld [vmem:[#allocation2 + $0x2d8] sm:$0xff]
    %v162 = vld [vmem:[#allocation2 + $0x2e0] sm:$0xff]
    %v163 = vld [vmem:[#allocation2 + $0x2e8] sm:$0xff]
    %v164 = vld [vmem:[#allocation2 + $0x2f0] sm:$0xff]
    %v165 = vld [vmem:[#allocation2 + $0x2f8] sm:$0xff]
    %v166 = vld [vmem:[#allocation2 + $0x300] sm:$0xff]
    %v167 = vld [vmem:[#allocation2 + $0x308] sm:$0xff]
    %v168 = vld [vmem:[#allocation2 + $0x310] sm:$0xff]
    %v169 = vld [vmem:[#allocation2 + $0x318] sm:$0xff]
    %v170 = vld [vmem:[#allocation2 + $0x320] sm:$0xff]
    %v171 = vld [vmem:[#allocation2 + $0x328] sm:$0xff]
    %v172 = vld [vmem:[#allocation2 + $0x330] sm:$0xff]
    %v173 = vld [vmem:[#allocation2 + $0x338] sm:$0xff]
    %v174 = vld [vmem:[#allocation2 + $0x340] sm:$0xff]
    %v175 = vld [vmem:[#allocation2 + $0x348] sm:$0xff]
    %v176 = vld [vmem:[#allocation2 + $0x350] sm:$0xff]
    %v177 = vld [vmem:[#allocation2 + $0x358] sm:$0xff]
    %v178 = vld [vmem:[#allocation2 + $0x360] sm:$0xff]
    %v179 = vld [vmem:[#allocation2 + $0x368] sm:$0xff]
    %v180 = vld [vmem:[#allocation2 + $0x370] sm:$0xff]
    %v181 = vld [vmem:[#allocation2 + $0x378] sm:$0xff]
    %v182 = vld [vmem:[#allocation2 + $0x380] sm:$0xff]
    %v183 = vld [vmem:[#allocation2 + $0x388] sm:$0xff]
    %v184 = vld [vmem:[#allocation2 + $0x390] sm:$0xff]
    %v185 = vld [vmem:[#allocation2 + $0x398] sm:$0xff]
    %v186 = vld [vmem:[#allocation2 + $0x3a0] sm:$0xff]
    %v187 = vld [vmem:[#allocation2 + $0x3a8] sm:$0xff]
    %v188 = vld [vmem:[#allocation2 + $0x3b0] sm:$0xff]
    %v189 = vld [vmem:[#allocation2 + $0x3b8] sm:$0xff]
    %v190 = vld [vmem:[#allocation2 + $0x3c0] sm:$0xff]
    %v191 = vld [vmem:[#allocation2 + $0x3c8] sm:$0xff]
    %v192 = vld [vmem:[#allocation2 + $0x3d0] sm:$0xff]
    %v193 = vld [vmem:[#allocation2 + $0x3d8] sm:$0xff]
    %v194 = vld [vmem:[#allocation2 + $0x3e0] sm:$0xff]
    %v195 = vld [vmem:[#allocation2 + $0x3e8] sm:$0xff]
    %v196 = vld [vmem:[#allocation2 + $0x3f0] sm:$0xff]
    %v197 = vld [vmem:[#allocation2 + $0x3f8] sm:$0xff]
    %v198 = vld [vmem:[#allocation2 + $0x400] sm:$0xff]
    %v199 = vld [vmem:[#allocation2 + $0x408] sm:$0xff]
    %v200 = vld [vmem:[#allocation2 + $0x410] sm:$0xff]
    %v201 = vld [vmem:[#allocation2 + $0x418] sm:$0xff]
    %v202 = vld [vmem:[#allocation2 + $0x420] sm:$0xff]
    %v203 = vld [vmem:[#allocation2 + $0x428] sm:$0xff]
    %v204 = vld [vmem:[#allocation2 + $0x430] sm:$0xff]
    %v205 = vld [vmem:[#allocation2 + $0x438] sm:$0xff]
    %v206 = vld [vmem:[#allocation2 + $0x440] sm:$0xff]
    %v207 = vld [vmem:[#allocation2 + $0x448] sm:$0xff]
    %v208 = vld [vmem:[#allocation2 + $0x450] sm:$0xff]
    %v209 = vld [vmem:[#allocation2 + $0x458] sm:$0xff]
    %v210 = vld [vmem:[#allocation2 + $0x460] sm:$0xff]
    %v211 = vld [vmem:[#allocation2 + $0x468] sm:$0xff]
    %v212 = vld [vmem:[#allocation2 + $0x470] sm:$0xff]
    %v213 = vld [vmem:[#allocation2 + $0x478] sm:$0xff]
    %v214 = vld [vmem:[#allocation2 + $0x480] sm:$0xff]
    %v215 = vld [vmem:[#allocation2 + $0x488] sm:$0xff]
    %v216 = vld [vmem:[#allocation2 + $0x490] sm:$0xff]
    %v217 = vld [vmem:[#allocation2 + $0x498] sm:$0xff]
    %v218 = vld [vmem:[#allocation2 + $0x4a0] sm:$0xff]
    %v219 = vld [vmem:[#allocation2 + $0x4a8] sm:$0xff]
    %v220 = vld [vmem:[#allocation2 + $0x4b0] sm:$0xff]
    %v221 = vld [vmem:[#allocation2 + $0x4b8] sm:$0xff]
    %v222 = vld [vmem:[#allocation2 + $0x4c0] sm:$0xff]
    %v223 = vld [vmem:[#allocation2 + $0x4c8] sm:$0xff]
    %v224 = vld [vmem:[#allocation2 + $0x4d0] sm:$0xff]
    %v225 = vld [vmem:[#allocation2 + $0x4d8] sm:$0xff]
    %v226 = vld [vmem:[#allocation2 + $0x4e0] sm:$0xff]
    %v227 = vld [vmem:[#allocation2 + $0x4e8] sm:$0xff]
    %v228 = vld [vmem:[#allocation2 + $0x4f0] sm:$0xff]
    %v229 = vld [vmem:[#allocation2 + $0x4f8] sm:$0xff]
    %v230 = vld [vmem:[#allocation2 + $0x500] sm:$0xff]
    %v231 = vld [vmem:[#allocation2 + $0x508] sm:$0xff]
    %v232 = vld [vmem:[#allocation2 + $0x510] sm:$0xff]
    %v233 = vld [vmem:[#allocation2 + $0x518] sm:$0xff]
    %v234 = vld [vmem:[#allocation2 + $0x520] sm:$0xff]
    %v235 = vld [vmem:[#allocation2 + $0x528] sm:$0xff]
    %v236 = vld [vmem:[#allocation2 + $0x530] sm:$0xff]
    %v237 = vld [vmem:[#allocation2 + $0x538] sm:$0xff]
    %v238 = vld [vmem:[#allocation2 + $0x540] sm:$0xff]
    %v239 = vld [vmem:[#allocation2 + $0x548] sm:$0xff]
    %v240 = vld [vmem:[#allocation2 + $0x550] sm:$0xff]
    %v241 = vld [vmem:[#allocation2 + $0x558] sm:$0xff]
    %v242 = vld [vmem:[#allocation2 + $0x560] sm:$0xff]
    %v243 = vld [vmem:[#allocation2 + $0x568] sm:$0xff]
    %v244 = vld [vmem:[#allocation2 + $0x570] sm:$0xff]
    %v245 = vld [vmem:[#allocation2 + $0x578] sm:$0xff]
    %v246 = vld [vmem:[#allocation2 + $0x580] sm:$0xff]
    %v247 = vld [vmem:[#allocation2 + $0x588] sm:$0xff]
    %v248 = vld [vmem:[#allocation2 + $0x590] sm:$0xff]
    %v249 = vld [vmem:[#allocation2 + $0x598] sm:$0xff]
    %v250 = vld [vmem:[#allocation2 + $0x5a0] sm:$0xff]
    %v251 = vld [vmem:[#allocation2 + $0x5a8] sm:$0xff]
    %v252 = vld [vmem:[#allocation2 + $0x5b0] sm:$0xff]
    %v253 = vld [vmem:[#allocation2 + $0x5b8] sm:$0xff]
    %v254 = vld [vmem:[#allocation2 + $0x5c0] sm:$0xff]
    %v255 = vld [vmem:[#allocation2 + $0x5c8] sm:$0xff]
    %v256 = vld [vmem:[#allocation2 + $0x5d0] sm:$0xff]
    %v257 = vld [vmem:[#allocation2 + $0x5d8] sm:$0xff]
    %v258 = vld [vmem:[#allocation2 + $0x5e0] sm:$0xff]
    %v259 = vld [vmem:[#allocation2 + $0x5e8] sm:$0xff]
    %v260 = vld [vmem:[#allocation2 + $0x5f0] sm:$0xff]
    %v261 = vld [vmem:[#allocation2 + $0x5f8] sm:$0xff]
    %v262 = vld [vmem:[#allocation2 + $0x600] sm:$0xff]
    %v263 = vld [vmem:[#allocation2 + $0x608] sm:$0xff]
    %v264 = vld [vmem:[#allocation2 + $0x610] sm:$0xff]
    %v265 = vld [vmem:[#allocation2 + $0x618] sm:$0xff]
    %v266 = vld [vmem:[%s2] sm:$0xf]
    %v268 = vperm.slane %v266, 0
    %v269 = vperm.slane %v266, 1
    %v270 = vperm.slane %v266, 2
    %v271 = vperm.slane %v266, 3
    %v472 = vunpack.c.l.b16 %v70
    %v473 = vunpack.c.h.b16 %v70
    %v474 = vunpack.c.l.b16 %v71
    %v475 = vunpack.c.h.b16 %v71
    %v476 = vunpack.c.l.b16 %v72
    %v477 = vunpack.c.h.b16 %v72
    %v478 = vunpack.c.l.b16 %v73
    %v479 = vunpack.c.h.b16 %v73
    %v480 = vunpack.c.l.b16 %v74
    %v481 = vunpack.c.h.b16 %v74
    %v482 = vunpack.c.l.b16 %v75
    %v483 = vunpack.c.h.b16 %v75
    %v484 = vunpack.c.l.b16 %v76
    %v485 = vunpack.c.h.b16 %v76
    %v486 = vunpack.c.l.b16 %v77
    %v487 = vunpack.c.h.b16 %v77
    %v488 = vunpack.c.l.b16 %v78
    %v489 = vunpack.c.h.b16 %v78
    %v490 = vunpack.c.l.b16 %v79
    %v491 = vunpack.c.h.b16 %v79
    %v492 = vunpack.c.l.b16 %v80
    %v493 = vunpack.c.h.b16 %v80
    %v494 = vunpack.c.l.b16 %v81
    %v495 = vunpack.c.h.b16 %v81
    %v496 = vunpack.c.l.b16 %v82
    %v497 = vunpack.c.h.b16 %v82
    %v498 = vunpack.c.l.b16 %v83
    %v499 = vunpack.c.h.b16 %v83
    %v500 = vunpack.c.l.b16 %v84
    %v501 = vunpack.c.h.b16 %v84
    %v502 = vunpack.c.l.b16 %v85
    %v503 = vunpack.c.h.b16 %v85
    %v504 = vunpack.c.l.b16 %v86
    %v505 = vunpack.c.h.b16 %v86
    %v506 = vunpack.c.l.b16 %v87
    %v507 = vunpack.c.h.b16 %v87
    %v508 = vunpack.c.l.b16 %v88
    %v509 = vunpack.c.h.b16 %v88
    %v510 = vunpack.c.l.b16 %v89
    %v511 = vunpack.c.h.b16 %v89
    %v512 = vunpack.c.l.b16 %v90
    %v513 = vunpack.c.h.b16 %v90
    %v514 = vunpack.c.l.b16 %v91
    %v515 = vunpack.c.h.b16 %v91
    %v516 = vunpack.c.l.b16 %v92
    %v517 = vunpack.c.h.b16 %v92
    %v518 = vunpack.c.l.b16 %v93
    %v519 = vunpack.c.h.b16 %v93
    %v520 = vunpack.c.l.b16 %v94
    %v521 = vunpack.c.h.b16 %v94
    %v522 = vunpack.c.l.b16 %v95
    %v523 = vunpack.c.h.b16 %v95
    %v524 = vunpack.c.l.b16 %v96
    %v525 = vunpack.c.h.b16 %v96
    %v526 = vunpack.c.l.b16 %v97
    %v527 = vunpack.c.h.b16 %v97
    %v528 = vunpack.c.l.b16 %v98
    %v529 = vunpack.c.h.b16 %v98
    %v530 = vunpack.c.l.b16 %v99
    %v531 = vunpack.c.h.b16 %v99
    %v532 = vunpack.c.l.b16 %v100
    %v533 = vunpack.c.h.b16 %v100
    %v534 = vunpack.c.l.b16 %v101
    %v535 = vunpack.c.h.b16 %v101
    %v536 = vunpack.c.l.b16 %v102
    %v537 = vunpack.c.h.b16 %v102
    %v538 = vunpack.c.l.b16 %v103
    %v539 = vunpack.c.h.b16 %v103
    %v540 = vunpack.c.l.b16 %v104
    %v541 = vunpack.c.h.b16 %v104
    %v542 = vunpack.c.l.b16 %v105
    %v543 = vunpack.c.h.b16 %v105
    %v544 = vunpack.c.l.b16 %v106
    %v545 = vunpack.c.h.b16 %v106
    %v546 = vunpack.c.l.b16 %v107
    %v547 = vunpack.c.h.b16 %v107
    %v548 = vunpack.c.l.b16 %v108
    %v549 = vunpack.c.h.b16 %v108
    %v550 = vunpack.c.l.b16 %v109
    %v551 = vunpack.c.h.b16 %v109
    %v552 = vunpack.c.l.b16 %v110
    %v553 = vunpack.c.h.b16 %v110
    %v554 = vunpack.c.l.b16 %v111
    %v555 = vunpack.c.h.b16 %v111
    %v556 = vunpack.c.l.b16 %v112
    %v557 = vunpack.c.h.b16 %v112
    %v558 = vunpack.c.l.b16 %v113
    %v559 = vunpack.c.h.b16 %v113
    %v560 = vunpack.c.l.b16 %v114
    %v561 = vunpack.c.h.b16 %v114
    %v562 = vunpack.c.l.b16 %v115
    %v563 = vunpack.c.h.b16 %v115
    %v564 = vunpack.c.l.b16 %v116
    %v565 = vunpack.c.h.b16 %v116
    %v566 = vunpack.c.l.b16 %v117
    %v567 = vunpack.c.h.b16 %v117
    %v568 = vunpack.c.l.b16 %v118
    %v569 = vunpack.c.h.b16 %v118
    %v570 = vunpack.c.l.b16 %v119
    %v571 = vunpack.c.h.b16 %v119
    %v572 = vunpack.c.l.b16 %v120
    %v573 = vunpack.c.h.b16 %v120
    %v574 = vunpack.c.l.b16 %v121
    %v575 = vunpack.c.h.b16 %v121
    %v576 = vunpack.c.l.b16 %v122
    %v577 = vunpack.c.h.b16 %v122
    %v578 = vunpack.c.l.b16 %v123
    %v579 = vunpack.c.h.b16 %v123
    %v580 = vunpack.c.l.b16 %v124
    %v581 = vunpack.c.h.b16 %v124
    %v582 = vunpack.c.l.b16 %v125
    %v583 = vunpack.c.h.b16 %v125
    %v584 = vunpack.c.l.b16 %v126
    %v585 = vunpack.c.h.b16 %v126
    %v586 = vunpack.c.l.b16 %v127
    %v587 = vunpack.c.h.b16 %v127
    %v588 = vunpack.c.l.b16 %v128
    %v589 = vunpack.c.h.b16 %v128
    %v590 = vunpack.c.l.b16 %v129
    %v591 = vunpack.c.h.b16 %v129
    %v592 = vunpack.c.l.b16 %v130
    %v593 = vunpack.c.h.b16 %v130
    %v594 = vunpack.c.l.b16 %v131
    %v595 = vunpack.c.h.b16 %v131
    %v596 = vunpack.c.l.b16 %v132
    %v597 = vunpack.c.h.b16 %v132
    %v598 = vunpack.c.l.b16 %v133
    %v599 = vunpack.c.h.b16 %v133
    %v600 = vunpack.c.l.b16 %v134
    %v601 = vunpack.c.h.b16 %v134
    %v602 = vunpack.c.l.b16 %v135
    %v603 = vunpack.c.h.b16 %v135
    %v604 = vunpack.c.l.b16 %v136
    %v605 = vunpack.c.h.b16 %v136
    %v606 = vunpack.c.l.b16 %v137
    %v607 = vunpack.c.h.b16 %v137
    %v608 = vunpack.c.l.b16 %v138
    %v609 = vunpack.c.h.b16 %v138
    %v610 = vunpack.c.l.b16 %v139
    %v611 = vunpack.c.h.b16 %v139
    %v612 = vunpack.c.l.b16 %v140
    %v613 = vunpack.c.h.b16 %v140
    %v614 = vunpack.c.l.b16 %v141
    %v615 = vunpack.c.h.b16 %v141
    %v616 = vunpack.c.l.b16 %v142
    %v617 = vunpack.c.h.b16 %v142
    %v618 = vunpack.c.l.b16 %v143
    %v619 = vunpack.c.h.b16 %v143
    %v620 = vunpack.c.l.b16 %v144
    %v621 = vunpack.c.h.b16 %v144
    %v622 = vunpack.c.l.b16 %v145
    %v623 = vunpack.c.h.b16 %v145
    %v624 = vunpack.c.l.b16 %v146
    %v625 = vunpack.c.h.b16 %v146
    %v626 = vunpack.c.l.b16 %v147
    %v627 = vunpack.c.h.b16 %v147
    %v628 = vunpack.c.l.b16 %v148
    %v629 = vunpack.c.h.b16 %v148
    %v630 = vunpack.c.l.b16 %v149
    %v631 = vunpack.c.h.b16 %v149
    %v632 = vunpack.c.l.b16 %v150
    %v633 = vunpack.c.h.b16 %v150
    %v634 = vunpack.c.l.b16 %v151
    %v635 = vunpack.c.h.b16 %v151
    %v636 = vunpack.c.l.b16 %v152
    %v637 = vunpack.c.h.b16 %v152
    %v638 = vunpack.c.l.b16 %v153
    %v639 = vunpack.c.h.b16 %v153
    %v640 = vunpack.c.l.b16 %v154
    %v641 = vunpack.c.h.b16 %v154
    %v642 = vunpack.c.l.b16 %v155
    %v643 = vunpack.c.h.b16 %v155
    %v644 = vunpack.c.l.b16 %v156
    %v645 = vunpack.c.h.b16 %v156
    %v646 = vunpack.c.l.b16 %v157
    %v647 = vunpack.c.h.b16 %v157
    %v648 = vunpack.c.l.b16 %v158
    %v649 = vunpack.c.h.b16 %v158
    %v650 = vunpack.c.l.b16 %v159
    %v651 = vunpack.c.h.b16 %v159
    %v652 = vunpack.c.l.b16 %v160
    %v653 = vunpack.c.h.b16 %v160
    %v654 = vunpack.c.l.b16 %v161
    %v655 = vunpack.c.h.b16 %v161
    %v656 = vunpack.c.l.b16 %v162
    %v657 = vunpack.c.h.b16 %v162
    %v658 = vunpack.c.l.b16 %v163
    %v659 = vunpack.c.h.b16 %v163
    %v660 = vunpack.c.l.b16 %v164
    %v661 = vunpack.c.h.b16 %v164
    %v662 = vunpack.c.l.b16 %v165
    %v663 = vunpack.c.h.b16 %v165
    %v664 = vunpack.c.l.b16 %v166
    %v665 = vunpack.c.h.b16 %v166
    %v666 = vunpack.c.l.b16 %v167
    %v667 = vunpack.c.h.b16 %v167
    %v668 = vunpack.c.l.b16 %v168
    %v669 = vunpack.c.h.b16 %v168
    %v670 = vunpack.c.l.b16 %v169
    %v671 = vunpack.c.h.b16 %v169
    %v672 = vunpack.c.l.b16 %v170
    %v673 = vunpack.c.h.b16 %v170
    %v674 = vunpack.c.l.b16 %v171
    %v675 = vunpack.c.h.b16 %v171
    %v676 = vunpack.c.l.b16 %v172
    %v677 = vunpack.c.h.b16 %v172
    %v678 = vunpack.c.l.b16 %v173
    %v679 = vunpack.c.h.b16 %v173
    %v680 = vunpack.c.l.b16 %v174
    %v681 = vunpack.c.h.b16 %v174
    %v682 = vunpack.c.l.b16 %v175
    %v683 = vunpack.c.h.b16 %v175
    %v684 = vunpack.c.l.b16 %v176
    %v685 = vunpack.c.h.b16 %v176
    %v686 = vunpack.c.l.b16 %v177
    %v687 = vunpack.c.h.b16 %v177
    %v688 = vunpack.c.l.b16 %v178
    %v689 = vunpack.c.h.b16 %v178
    %v690 = vunpack.c.l.b16 %v179
    %v691 = vunpack.c.h.b16 %v179
    %v692 = vunpack.c.l.b16 %v180
    %v693 = vunpack.c.h.b16 %v180
    %v694 = vunpack.c.l.b16 %v181
    %v695 = vunpack.c.h.b16 %v181
    %v696 = vunpack.c.l.b16 %v182
    %v697 = vunpack.c.h.b16 %v182
    %v698 = vunpack.c.l.b16 %v183
    %v699 = vunpack.c.h.b16 %v183
    %v700 = vunpack.c.l.b16 %v184
    %v701 = vunpack.c.h.b16 %v184
    %v702 = vunpack.c.l.b16 %v185
    %v703 = vunpack.c.h.b16 %v185
    %v704 = vunpack.c.l.b16 %v186
    %v705 = vunpack.c.h.b16 %v186
    %v706 = vunpack.c.l.b16 %v187
    %v707 = vunpack.c.h.b16 %v187
    %v708 = vunpack.c.l.b16 %v188
    %v709 = vunpack.c.h.b16 %v188
    %v710 = vunpack.c.l.b16 %v189
    %v711 = vunpack.c.h.b16 %v189
    %v712 = vunpack.c.l.b16 %v190
    %v713 = vunpack.c.h.b16 %v190
    %v714 = vunpack.c.l.b16 %v191
    %v715 = vunpack.c.h.b16 %v191
    %v716 = vunpack.c.l.b16 %v192
    %v717 = vunpack.c.h.b16 %v192
    %v718 = vunpack.c.l.b16 %v193
    %v719 = vunpack.c.h.b16 %v193
    %v720 = vunpack.c.l.b16 %v194
    %v721 = vunpack.c.h.b16 %v194
    %v722 = vunpack.c.l.b16 %v195
    %v723 = vunpack.c.h.b16 %v195
    %v724 = vunpack.c.l.b16 %v196
    %v725 = vunpack.c.h.b16 %v196
    %v726 = vunpack.c.l.b16 %v197
    %v727 = vunpack.c.h.b16 %v197
    %v728 = vunpack.c.l.b16 %v198
    %v729 = vunpack.c.h.b16 %v198
    %v730 = vunpack.c.l.b16 %v199
    %v731 = vunpack.c.h.b16 %v199
    %v732 = vunpack.c.l.b16 %v200
    %v733 = vunpack.c.h.b16 %v200
    %v734 = vunpack.c.l.b16 %v201
    %v735 = vunpack.c.h.b16 %v201
    %v736 = vunpack.c.l.b16 %v202
    %v737 = vunpack.c.h.b16 %v202
    %v738 = vunpack.c.l.b16 %v203
    %v739 = vunpack.c.h.b16 %v203
    %v740 = vunpack.c.l.b16 %v204
    %v741 = vunpack.c.h.b16 %v204
    %v742 = vunpack.c.l.b16 %v205
    %v743 = vunpack.c.h.b16 %v205
    %v744 = vunpack.c.l.b16 %v206
    %v745 = vunpack.c.h.b16 %v206
    %v746 = vunpack.c.l.b16 %v207
    %v747 = vunpack.c.h.b16 %v207
    %v748 = vunpack.c.l.b16 %v208
    %v749 = vunpack.c.h.b16 %v208
    %v750 = vunpack.c.l.b16 %v209
    %v751 = vunpack.c.h.b16 %v209
    %v752 = vunpack.c.l.b16 %v210
    %v753 = vunpack.c.h.b16 %v210
    %v754 = vunpack.c.l.b16 %v211
    %v755 = vunpack.c.h.b16 %v211
    %v756 = vunpack.c.l.b16 %v212
    %v757 = vunpack.c.h.b16 %v212
    %v758 = vunpack.c.l.b16 %v213
    %v759 = vunpack.c.h.b16 %v213
    %v760 = vunpack.c.l.b16 %v214
    %v761 = vunpack.c.h.b16 %v214
    %v762 = vunpack.c.l.b16 %v215
    %v763 = vunpack.c.h.b16 %v215
    %v764 = vunpack.c.l.b16 %v216
    %v765 = vunpack.c.h.b16 %v216
    %v766 = vunpack.c.l.b16 %v217
    %v767 = vunpack.c.h.b16 %v217
    %v768 = vunpack.c.l.b16 %v218
    %v769 = vunpack.c.h.b16 %v218
    %v770 = vunpack.c.l.b16 %v219
    %v771 = vunpack.c.h.b16 %v219
    %v772 = vunpack.c.l.b16 %v220
    %v773 = vunpack.c.h.b16 %v220
    %v774 = vunpack.c.l.b16 %v221
    %v775 = vunpack.c.h.b16 %v221
    %v776 = vunpack.c.l.b16 %v222
    %v777 = vunpack.c.h.b16 %v222
    %v778 = vunpack.c.l.b16 %v223
    %v779 = vunpack.c.h.b16 %v223
    %v780 = vunpack.c.l.b16 %v224
    %v781 = vunpack.c.h.b16 %v224
    %v782 = vunpack.c.l.b16 %v225
    %v783 = vunpack.c.h.b16 %v225
    %v784 = vunpack.c.l.b16 %v226
    %v785 = vunpack.c.h.b16 %v226
    %v786 = vunpack.c.l.b16 %v227
    %v787 = vunpack.c.h.b16 %v227
    %v788 = vunpack.c.l.b16 %v228
    %v789 = vunpack.c.h.b16 %v228
    %v790 = vunpack.c.l.b16 %v229
    %v791 = vunpack.c.h.b16 %v229
    %v792 = vunpack.c.l.b16 %v230
    %v793 = vunpack.c.h.b16 %v230
    %v794 = vunpack.c.l.b16 %v231
    %v795 = vunpack.c.h.b16 %v231
    %v796 = vunpack.c.l.b16 %v232
    %v797 = vunpack.c.h.b16 %v232
    %v798 = vunpack.c.l.b16 %v233
    %v799 = vunpack.c.h.b16 %v233
    %v800 = vunpack.c.l.b16 %v234
    %v801 = vunpack.c.h.b16 %v234
    %v802 = vunpack.c.l.b16 %v235
    %v803 = vunpack.c.h.b16 %v235
    %v804 = vunpack.c.l.b16 %v236
    %v805 = vunpack.c.h.b16 %v236
    %v806 = vunpack.c.l.b16 %v237
    %v807 = vunpack.c.h.b16 %v237
    %v808 = vunpack.c.l.b16 %v238
    %v809 = vunpack.c.h.b16 %v238
    %v810 = vunpack.c.l.b16 %v239
    %v811 = vunpack.c.h.b16 %v239
    %v812 = vunpack.c.l.b16 %v240
    %v813 = vunpack.c.h.b16 %v240
    %v814 = vunpack.c.l.b16 %v241
    %v815 = vunpack.c.h.b16 %v241
    %v816 = vunpack.c.l.b16 %v242
    %v817 = vunpack.c.h.b16 %v242
    %v818 = vunpack.c.l.b16 %v243
    %v819 = vunpack.c.h.b16 %v243
    %v820 = vunpack.c.l.b16 %v244
    %v821 = vunpack.c.h.b16 %v244
    %v822 = vunpack.c.l.b16 %v245
    %v823 = vunpack.c.h.b16 %v245
    %v824 = vunpack.c.l.b16 %v246
    %v825 = vunpack.c.h.b16 %v246
    %v826 = vunpack.c.l.b16 %v247
    %v827 = vunpack.c.h.b16 %v247
    %v828 = vunpack.c.l.b16 %v248
    %v829 = vunpack.c.h.b16 %v248
    %v830 = vunpack.c.l.b16 %v249
    %v831 = vunpack.c.h.b16 %v249
    %v832 = vunpack.c.l.b16 %v250
    %v833 = vunpack.c.h.b16 %v250
    %v834 = vunpack.c.l.b16 %v251
    %v835 = vunpack.c.h.b16 %v251
    %v836 = vunpack.c.l.b16 %v252
    %v837 = vunpack.c.h.b16 %v252
    %v838 = vunpack.c.l.b16 %v253
    %v839 = vunpack.c.h.b16 %v253
    %v840 = vunpack.c.l.b16 %v254
    %v841 = vunpack.c.h.b16 %v254
    %v842 = vunpack.c.l.b16 %v255
    %v843 = vunpack.c.h.b16 %v255
    %v844 = vunpack.c.l.b16 %v256
    %v845 = vunpack.c.h.b16 %v256
    %v846 = vunpack.c.l.b16 %v257
    %v847 = vunpack.c.h.b16 %v257
    %v848 = vunpack.c.l.b16 %v258
    %v849 = vunpack.c.h.b16 %v258
    %v850 = vunpack.c.l.b16 %v259
    %v851 = vunpack.c.h.b16 %v259
    %v852 = vunpack.c.l.b16 %v260
    %v853 = vunpack.c.h.b16 %v260
    %v854 = vunpack.c.l.b16 %v261
    %v855 = vunpack.c.h.b16 %v261
    %v856 = vunpack.c.l.b16 %v262
    %v857 = vunpack.c.h.b16 %v262
    %v858 = vunpack.c.l.b16 %v263
    %v859 = vunpack.c.h.b16 %v263
    %v860 = vunpack.c.l.b16 %v264
    %v861 = vunpack.c.h.b16 %v264
    %v862 = vunpack.c.l.b16 %v265
    %v863 = vunpack.c.h.b16 %v265
    %v864 = vpack.c.b16 %v476, %v472
    %v865 = vpack.c.b16 %v477, %v473
    %v866 = vpack.c.b16 %v478, %v474
    %v867 = vpack.c.b16 %v479, %v475
    %v868 = vpack.c.b16 %v484, %v480
    %v869 = vpack.c.b16 %v485, %v481
    %v870 = vpack.c.b16 %v486, %v482
    %v871 = vpack.c.b16 %v487, %v483
    %v872 = vpack.c.b16 %v492, %v488
    %v873 = vpack.c.b16 %v493, %v489
    %v874 = vpack.c.b16 %v494, %v490
    %v875 = vpack.c.b16 %v495, %v491
    %v876 = vpack.c.b16 %v500, %v496
    %v877 = vpack.c.b16 %v501, %v497
    %v878 = vpack.c.b16 %v502, %v498
    %v879 = vpack.c.b16 %v503, %v499
    %v880 = vpack.c.b16 %v508, %v504
    %v881 = vpack.c.b16 %v509, %v505
    %v882 = vpack.c.b16 %v510, %v506
    %v883 = vpack.c.b16 %v511, %v507
    %v884 = vpack.c.b16 %v516, %v512
    %v885 = vpack.c.b16 %v517, %v513
    %v886 = vpack.c.b16 %v518, %v514
    %v887 = vpack.c.b16 %v519, %v515
    %v888 = vpack.c.b16 %v524, %v520
    %v889 = vpack.c.b16 %v525, %v521
    %v890 = vpack.c.b16 %v526, %v522
    %v891 = vpack.c.b16 %v527, %v523
    %v892 = vpack.c.b16 %v532, %v528
    %v893 = vpack.c.b16 %v533, %v529
    %v894 = vpack.c.b16 %v534, %v530
    %v895 = vpack.c.b16 %v535, %v531
    %v896 = vpack.c.b16 %v540, %v536
    %v897 = vpack.c.b16 %v541, %v537
    %v898 = vpack.c.b16 %v542, %v538
    %v899 = vpack.c.b16 %v543, %v539
    %v900 = vpack.c.b16 %v548, %v544
    %v901 = vpack.c.b16 %v549, %v545
    %v902 = vpack.c.b16 %v550, %v546
    %v903 = vpack.c.b16 %v551, %v547
    %v904 = vpack.c.b16 %v556, %v552
    %v905 = vpack.c.b16 %v557, %v553
    %v906 = vpack.c.b16 %v558, %v554
    %v907 = vpack.c.b16 %v559, %v555
    %v908 = vpack.c.b16 %v564, %v560
    %v909 = vpack.c.b16 %v565, %v561
    %v910 = vpack.c.b16 %v566, %v562
    %v911 = vpack.c.b16 %v567, %v563
    %v912 = vpack.c.b16 %v572, %v568
    %v913 = vpack.c.b16 %v573, %v569
    %v914 = vpack.c.b16 %v574, %v570
    %v915 = vpack.c.b16 %v575, %v571
    %v916 = vpack.c.b16 %v580, %v576
    %v917 = vpack.c.b16 %v581, %v577
    %v918 = vpack.c.b16 %v582, %v578
    %v919 = vpack.c.b16 %v583, %v579
    %v920 = vpack.c.b16 %v588, %v584
    %v921 = vpack.c.b16 %v589, %v585
    %v922 = vpack.c.b16 %v590, %v586
    %v923 = vpack.c.b16 %v591, %v587
    %v924 = vpack.c.b16 %v596, %v592
    %v925 = vpack.c.b16 %v597, %v593
    %v926 = vpack.c.b16 %v598, %v594
    %v927 = vpack.c.b16 %v599, %v595
    %v928 = vpack.c.b16 %v604, %v600
    %v929 = vpack.c.b16 %v605, %v601
    %v930 = vpack.c.b16 %v606, %v602
    %v931 = vpack.c.b16 %v607, %v603
    %v932 = vpack.c.b16 %v612, %v608
    %v933 = vpack.c.b16 %v613, %v609
    %v934 = vpack.c.b16 %v614, %v610
    %v935 = vpack.c.b16 %v615, %v611
    %v936 = vpack.c.b16 %v620, %v616
    %v937 = vpack.c.b16 %v621, %v617
    %v938 = vpack.c.b16 %v622, %v618
    %v939 = vpack.c.b16 %v623, %v619
    %v940 = vpack.c.b16 %v628, %v624
    %v941 = vpack.c.b16 %v629, %v625
    %v942 = vpack.c.b16 %v630, %v626
    %v943 = vpack.c.b16 %v631, %v627
    %v944 = vpack.c.b16 %v636, %v632
    %v945 = vpack.c.b16 %v637, %v633
    %v946 = vpack.c.b16 %v638, %v634
    %v947 = vpack.c.b16 %v639, %v635
    %v948 = vpack.c.b16 %v644, %v640
    %v949 = vpack.c.b16 %v645, %v641
    %v950 = vpack.c.b16 %v646, %v642
    %v951 = vpack.c.b16 %v647, %v643
    %v952 = vpack.c.b16 %v652, %v648
    %v953 = vpack.c.b16 %v653, %v649
    %v954 = vpack.c.b16 %v654, %v650
    %v955 = vpack.c.b16 %v655, %v651
    %v956 = vpack.c.b16 %v660, %v656
    %v957 = vpack.c.b16 %v661, %v657
    %v958 = vpack.c.b16 %v662, %v658
    %v959 = vpack.c.b16 %v663, %v659
    %v960 = vpack.c.b16 %v668, %v664
    %v961 = vpack.c.b16 %v669, %v665
    %v962 = vpack.c.b16 %v670, %v666
    %v963 = vpack.c.b16 %v671, %v667
    %v964 = vpack.c.b16 %v676, %v672
    %v965 = vpack.c.b16 %v677, %v673
    %v966 = vpack.c.b16 %v678, %v674
    %v967 = vpack.c.b16 %v679, %v675
    %v968 = vpack.c.b16 %v684, %v680
    %v969 = vpack.c.b16 %v685, %v681
    %v970 = vpack.c.b16 %v686, %v682
    %v971 = vpack.c.b16 %v687, %v683
    %v972 = vpack.c.b16 %v692, %v688
    %v973 = vpack.c.b16 %v693, %v689
    %v974 = vpack.c.b16 %v694, %v690
    %v975 = vpack.c.b16 %v695, %v691
    %v976 = vpack.c.b16 %v700, %v696
    %v977 = vpack.c.b16 %v701, %v697
    %v978 = vpack.c.b16 %v702, %v698
    %v979 = vpack.c.b16 %v703, %v699
    %v980 = vpack.c.b16 %v708, %v704
    %v981 = vpack.c.b16 %v709, %v705
    %v982 = vpack.c.b16 %v710, %v706
    %v983 = vpack.c.b16 %v711, %v707
    %v984 = vpack.c.b16 %v716, %v712
    %v985 = vpack.c.b16 %v717, %v713
    %v986 = vpack.c.b16 %v718, %v714
    %v987 = vpack.c.b16 %v719, %v715
    %v988 = vpack.c.b16 %v724, %v720
    %v989 = vpack.c.b16 %v725, %v721
    %v990 = vpack.c.b16 %v726, %v722
    %v991 = vpack.c.b16 %v727, %v723
    %v992 = vpack.c.b16 %v732, %v728
    %v993 = vpack.c.b16 %v733, %v729
    %v994 = vpack.c.b16 %v734, %v730
    %v995 = vpack.c.b16 %v735, %v731
    %v996 = vpack.c.b16 %v740, %v736
    %v997 = vpack.c.b16 %v741, %v737
    %v998 = vpack.c.b16 %v742, %v738
    %v999 = vpack.c.b16 %v743, %v739
    %v1000 = vpack.c.b16 %v748, %v744
    %v1001 = vpack.c.b16 %v749, %v745
    %v1002 = vpack.c.b16 %v750, %v746
    %v1003 = vpack.c.b16 %v751, %v747
    %v1004 = vpack.c.b16 %v756, %v752
    %v1005 = vpack.c.b16 %v757, %v753
    %v1006 = vpack.c.b16 %v758, %v754
    %v1007 = vpack.c.b16 %v759, %v755
    %v1008 = vpack.c.b16 %v764, %v760
    %v1009 = vpack.c.b16 %v765, %v761
    %v1010 = vpack.c.b16 %v766, %v762
    %v1011 = vpack.c.b16 %v767, %v763
    %v1012 = vpack.c.b16 %v772, %v768
    %v1013 = vpack.c.b16 %v773, %v769
    %v1014 = vpack.c.b16 %v774, %v770
    %v1015 = vpack.c.b16 %v775, %v771
    %v1016 = vpack.c.b16 %v780, %v776
    %v1017 = vpack.c.b16 %v781, %v777
    %v1018 = vpack.c.b16 %v782, %v778
    %v1019 = vpack.c.b16 %v783, %v779
    %v1020 = vpack.c.b16 %v788, %v784
    %v1021 = vpack.c.b16 %v789, %v785
    %v1022 = vpack.c.b16 %v790, %v786
    %v1023 = vpack.c.b16 %v791, %v787
    %v1024 = vpack.c.b16 %v796, %v792
    %v1025 = vpack.c.b16 %v797, %v793
    %v1026 = vpack.c.b16 %v798, %v794
    %v1027 = vpack.c.b16 %v799, %v795
    %v1028 = vpack.c.b16 %v804, %v800
    %v1029 = vpack.c.b16 %v805, %v801
    %v1030 = vpack.c.b16 %v806, %v802
    %v1031 = vpack.c.b16 %v807, %v803
    %v1032 = vpack.c.b16 %v812, %v808
    %v1033 = vpack.c.b16 %v813, %v809
    %v1034 = vpack.c.b16 %v814, %v810
    %v1035 = vpack.c.b16 %v815, %v811
    %v1036 = vpack.c.b16 %v820, %v816
    %v1037 = vpack.c.b16 %v821, %v817
    %v1038 = vpack.c.b16 %v822, %v818
    %v1039 = vpack.c.b16 %v823, %v819
    %v1040 = vpack.c.b16 %v828, %v824
    %v1041 = vpack.c.b16 %v829, %v825
    %v1042 = vpack.c.b16 %v830, %v826
    %v1043 = vpack.c.b16 %v831, %v827
    %v1044 = vpack.c.b16 %v836, %v832
    %v1045 = vpack.c.b16 %v837, %v833
    %v1046 = vpack.c.b16 %v838, %v834
    %v1047 = vpack.c.b16 %v839, %v835
    %v1048 = vpack.c.b16 %v844, %v840
    %v1049 = vpack.c.b16 %v845, %v841
    %v1050 = vpack.c.b16 %v846, %v842
    %v1051 = vpack.c.b16 %v847, %v843
    %v1052 = vpack.c.b16 %v852, %v848
    %v1053 = vpack.c.b16 %v853, %v849
    %v1054 = vpack.c.b16 %v854, %v850
    %v1055 = vpack.c.b16 %v855, %v851
    %v1056 = vpack.c.b16 %v860, %v856
    %v1057 = vpack.c.b16 %v861, %v857
    %v1058 = vpack.c.b16 %v862, %v858
    %v1059 = vpack.c.b16 %v863, %v859
    %vm1256 = vcmask 130048
    %v1258 = vsel %vm1256, %v69, 0
    %1260 = vmatpush.bf16.msra.mxu0 %v892
    %1261 = vmatpush.bf16.msra.mxu0 %v888
    %1262 = vmatpush.bf16.msra.mxu0 %v884
    %1263 = vmatpush.bf16.msra.mxu0 %v880
    %1264 = vmatpush.bf16.msra.mxu0 %v876
    %1265 = vmatpush.bf16.msra.mxu0 %v872
    %1266 = vmatpush.bf16.msra.mxu0 %v868
    %1267 = vmatpush.bf16.msra.mxu0 %v864
    %1268 = vmatmul.bf16.gmra.mxu0 %v63
    %v1269 = vpop.f32.mrf.mxu0
    %v1270 = vadd.f32 %v268, %v1269
    %v1271 = vpop.f32.mrf.mxu0
    %1272 = vdwg.mxu0
    %1273 = vmatpush.bf16.msra.mxu0 %v924
    %1274 = vmatpush.bf16.msra.mxu0 %v920
    %1275 = vmatpush.bf16.msra.mxu0 %v916
    %1276 = vmatpush.bf16.msra.mxu0 %v912
    %1277 = vmatpush.bf16.msra.mxu0 %v908
    %1278 = vmatpush.bf16.msra.mxu0 %v904
    %1279 = vmatpush.bf16.msra.mxu0 %v900
    %1280 = vmatpush.bf16.msra.mxu0 %v896
    %1281 = vmatmul.bf16.gmra.mxu0 %v64
    %v1282 = vpop.f32.mrf.mxu0
    %v1283 = vadd.f32 %v1270, %v1282
    %v1284 = vpop.f32.mrf.mxu0
    %1285 = vdwg.mxu0
    %1286 = vmatpush.bf16.msra.mxu0 %v956
    %1287 = vmatpush.bf16.msra.mxu0 %v952
    %1288 = vmatpush.bf16.msra.mxu0 %v948
    %1289 = vmatpush.bf16.msra.mxu0 %v944
    %1290 = vmatpush.bf16.msra.mxu0 %v940
    %1291 = vmatpush.bf16.msra.mxu0 %v936
    %1292 = vmatpush.bf16.msra.mxu0 %v932
    %1293 = vmatpush.bf16.msra.mxu0 %v928
    %1294 = vmatmul.bf16.gmra.mxu0 %v65
    %v1295 = vpop.f32.mrf.mxu0
    %v1296 = vadd.f32 %v1283, %v1295
    %v1297 = vpop.f32.mrf.mxu0
    %1298 = vdwg.mxu0
    %1299 = vmatpush.bf16.msra.mxu0 %v988
    %1300 = vmatpush.bf16.msra.mxu0 %v984
    %1301 = vmatpush.bf16.msra.mxu0 %v980
    %1302 = vmatpush.bf16.msra.mxu0 %v976
    %1303 = vmatpush.bf16.msra.mxu0 %v972
    %1304 = vmatpush.bf16.msra.mxu0 %v968
    %1305 = vmatpush.bf16.msra.mxu0 %v964
    %1306 = vmatpush.bf16.msra.mxu0 %v960
    %1307 = vmatmul.bf16.gmra.mxu0 %v66
    %v1308 = vpop.f32.mrf.mxu0
    %v1309 = vadd.f32 %v1296, %v1308
    %v1310 = vpop.f32.mrf.mxu0
    %1311 = vdwg.mxu0
    %1312 = vmatpush.bf16.msra.mxu0 %v1020
    %1313 = vmatpush.bf16.msra.mxu0 %v1016
    %1314 = vmatpush.bf16.msra.mxu0 %v1012
    %1315 = vmatpush.bf16.msra.mxu0 %v1008
    %1316 = vmatpush.bf16.msra.mxu0 %v1004
    %1317 = vmatpush.bf16.msra.mxu0 %v1000
    %1318 = vmatpush.bf16.msra.mxu0 %v996
    %1319 = vmatpush.bf16.msra.mxu0 %v992
    %1320 = vmatmul.bf16.gmra.mxu0 %v67
    %v1321 = vpop.f32.mrf.mxu0
    %v1322 = vadd.f32 %v1309, %v1321
    %v1323 = vpop.f32.mrf.mxu0
    %1324 = vdwg.mxu0
    %1325 = vmatpush.bf16.msra.mxu0 %v1052
    %1326 = vmatpush.bf16.msra.mxu0 %v1048
    %1327 = vmatpush.bf16.msra.mxu0 %v1044
    %1328 = vmatpush.bf16.msra.mxu0 %v1040
    %1329 = vmatpush.bf16.msra.mxu0 %v1036
    %1330 = vmatpush.bf16.msra.mxu0 %v1032
    %1331 = vmatpush.bf16.msra.mxu0 %v1028
    %1332 = vmatpush.bf16.msra.mxu0 %v1024
    %1333 = vmatmul.bf16.gmra.mxu0 %v68
    %v1334 = vpop.f32.mrf.mxu0
    %v1335 = vadd.f32 %v1322, %v1334
    %v1336 = vpop.f32.mrf.mxu0
    %1337 = vdwg.mxu0
    %1338 = vmatpush.bf16.msra.mxu0 0
    %1339 = vmatpush.bf16.msra.mxu0 0
    %1340 = vmatpush.bf16.msra.mxu0 0
    %1341 = vmatpush.bf16.msra.mxu0 0
    %1342 = vmatpush.bf16.msra.mxu0 0
    %1343 = vmatpush.bf16.msra.mxu0 0
    %1344 = vmatpush.bf16.msra.mxu0 0
    %1345 = vmatpush.bf16.msra.mxu0 %v1056
    %1346 = vmatmul.bf16.gmra.mxu0 %v1258
    %v1347 = vpop.f32.mrf.mxu0
    %v1348 = vadd.f32 %v1335, %v1347
    %v1349 = vpop.f32.mrf.mxu0
    %1350 = vdwg.mxu0
    %1351 = vmatpush.bf16.msra.mxu0 %v893
    %1352 = vmatpush.bf16.msra.mxu0 %v889
    %1353 = vmatpush.bf16.msra.mxu0 %v885
    %1354 = vmatpush.bf16.msra.mxu0 %v881
    %1355 = vmatpush.bf16.msra.mxu0 %v877
    %1356 = vmatpush.bf16.msra.mxu0 %v873
    %1357 = vmatpush.bf16.msra.mxu0 %v869
    %1358 = vmatpush.bf16.msra.mxu0 %v865
    %1359 = vmatmul.bf16.gmra.mxu0 %v63
    %v1360 = vpop.f32.mrf.mxu0
    %v1361 = vadd.f32 %v269, %v1360
    %v1362 = vpop.f32.mrf.mxu0
    %1363 = vdwg.mxu0
    %1364 = vmatpush.bf16.msra.mxu0 %v925
    %1365 = vmatpush.bf16.msra.mxu0 %v921
    %1366 = vmatpush.bf16.msra.mxu0 %v917
    %1367 = vmatpush.bf16.msra.mxu0 %v913
    %1368 = vmatpush.bf16.msra.mxu0 %v909
    %1369 = vmatpush.bf16.msra.mxu0 %v905
    %1370 = vmatpush.bf16.msra.mxu0 %v901
    %1371 = vmatpush.bf16.msra.mxu0 %v897
    %1372 = vmatmul.bf16.gmra.mxu0 %v64
    %v1373 = vpop.f32.mrf.mxu0
    %v1374 = vadd.f32 %v1361, %v1373
    %v1375 = vpop.f32.mrf.mxu0
    %1376 = vdwg.mxu0
    %1377 = vmatpush.bf16.msra.mxu0 %v957
    %1378 = vmatpush.bf16.msra.mxu0 %v953
    %1379 = vmatpush.bf16.msra.mxu0 %v949
    %1380 = vmatpush.bf16.msra.mxu0 %v945
    %1381 = vmatpush.bf16.msra.mxu0 %v941
    %1382 = vmatpush.bf16.msra.mxu0 %v937
    %1383 = vmatpush.bf16.msra.mxu0 %v933
    %1384 = vmatpush.bf16.msra.mxu0 %v929
    %1385 = vmatmul.bf16.gmra.mxu0 %v65
    %v1386 = vpop.f32.mrf.mxu0
    %v1387 = vadd.f32 %v1374, %v1386
    %v1388 = vpop.f32.mrf.mxu0
    %1389 = vdwg.mxu0
    %1390 = vmatpush.bf16.msra.mxu0 %v989
    %1391 = vmatpush.bf16.msra.mxu0 %v985
    %1392 = vmatpush.bf16.msra.mxu0 %v981
    %1393 = vmatpush.bf16.msra.mxu0 %v977
    %1394 = vmatpush.bf16.msra.mxu0 %v973
    %1395 = vmatpush.bf16.msra.mxu0 %v969
    %1396 = vmatpush.bf16.msra.mxu0 %v965
    %1397 = vmatpush.bf16.msra.mxu0 %v961
    %1398 = vmatmul.bf16.gmra.mxu0 %v66
    %v1399 = vpop.f32.mrf.mxu0
    %v1400 = vadd.f32 %v1387, %v1399
    %v1401 = vpop.f32.mrf.mxu0
    %1402 = vdwg.mxu0
    %1403 = vmatpush.bf16.msra.mxu0 %v1021
    %1404 = vmatpush.bf16.msra.mxu0 %v1017
    %1405 = vmatpush.bf16.msra.mxu0 %v1013
    %1406 = vmatpush.bf16.msra.mxu0 %v1009
    %1407 = vmatpush.bf16.msra.mxu0 %v1005
    %1408 = vmatpush.bf16.msra.mxu0 %v1001
    %1409 = vmatpush.bf16.msra.mxu0 %v997
    %1410 = vmatpush.bf16.msra.mxu0 %v993
    %1411 = vmatmul.bf16.gmra.mxu0 %v67
    %v1412 = vpop.f32.mrf.mxu0
    %v1413 = vadd.f32 %v1400, %v1412
    %v1414 = vpop.f32.mrf.mxu0
    %1415 = vdwg.mxu0
    %1416 = vmatpush.bf16.msra.mxu0 %v1053
    %1417 = vmatpush.bf16.msra.mxu0 %v1049
    %1418 = vmatpush.bf16.msra.mxu0 %v1045
    %1419 = vmatpush.bf16.msra.mxu0 %v1041
    %1420 = vmatpush.bf16.msra.mxu0 %v1037
    %1421 = vmatpush.bf16.msra.mxu0 %v1033
    %1422 = vmatpush.bf16.msra.mxu0 %v1029
    %1423 = vmatpush.bf16.msra.mxu0 %v1025
    %1424 = vmatmul.bf16.gmra.mxu0 %v68
    %v1425 = vpop.f32.mrf.mxu0
    %v1426 = vadd.f32 %v1413, %v1425
    %v1427 = vpop.f32.mrf.mxu0
    %1428 = vdwg.mxu0
    %1429 = vmatpush.bf16.msra.mxu0 0
    %1430 = vmatpush.bf16.msra.mxu0 0
    %1431 = vmatpush.bf16.msra.mxu0 0
    %1432 = vmatpush.bf16.msra.mxu0 0
    %1433 = vmatpush.bf16.msra.mxu0 0
    %1434 = vmatpush.bf16.msra.mxu0 0
    %1435 = vmatpush.bf16.msra.mxu0 0
    %1436 = vmatpush.bf16.msra.mxu0 %v1057
    %1437 = vmatmul.bf16.gmra.mxu0 %v1258
    %v1438 = vpop.f32.mrf.mxu0
    %v1439 = vadd.f32 %v1426, %v1438
    %v1440 = vpop.f32.mrf.mxu0
    %1441 = vdwg.mxu0
    %1442 = vmatpush.bf16.msra.mxu0 %v894
    %1443 = vmatpush.bf16.msra.mxu0 %v890
    %1444 = vmatpush.bf16.msra.mxu0 %v886
    %1445 = vmatpush.bf16.msra.mxu0 %v882
    %1446 = vmatpush.bf16.msra.mxu0 %v878
    %1447 = vmatpush.bf16.msra.mxu0 %v874
    %1448 = vmatpush.bf16.msra.mxu0 %v870
    %1449 = vmatpush.bf16.msra.mxu0 %v866
    %1450 = vmatmul.bf16.gmra.mxu0 %v63
    %v1451 = vpop.f32.mrf.mxu0
    %v1452 = vadd.f32 %v270, %v1451
    %v1453 = vpop.f32.mrf.mxu0
    %1454 = vdwg.mxu0
    %1455 = vmatpush.bf16.msra.mxu0 %v926
    %1456 = vmatpush.bf16.msra.mxu0 %v922
    %1457 = vmatpush.bf16.msra.mxu0 %v918
    %1458 = vmatpush.bf16.msra.mxu0 %v914
    %1459 = vmatpush.bf16.msra.mxu0 %v910
    %1460 = vmatpush.bf16.msra.mxu0 %v906
    %1461 = vmatpush.bf16.msra.mxu0 %v902
    %1462 = vmatpush.bf16.msra.mxu0 %v898
    %1463 = vmatmul.bf16.gmra.mxu0 %v64
    %v1464 = vpop.f32.mrf.mxu0
    %v1465 = vadd.f32 %v1452, %v1464
    %v1466 = vpop.f32.mrf.mxu0
    %1467 = vdwg.mxu0
    %1468 = vmatpush.bf16.msra.mxu0 %v958
    %1469 = vmatpush.bf16.msra.mxu0 %v954
    %1470 = vmatpush.bf16.msra.mxu0 %v950
    %1471 = vmatpush.bf16.msra.mxu0 %v946
    %1472 = vmatpush.bf16.msra.mxu0 %v942
    %1473 = vmatpush.bf16.msra.mxu0 %v938
    %1474 = vmatpush.bf16.msra.mxu0 %v934
    %1475 = vmatpush.bf16.msra.mxu0 %v930
    %1476 = vmatmul.bf16.gmra.mxu0 %v65
    %v1477 = vpop.f32.mrf.mxu0
    %v1478 = vadd.f32 %v1465, %v1477
    %v1479 = vpop.f32.mrf.mxu0
    %1480 = vdwg.mxu0
    %1481 = vmatpush.bf16.msra.mxu0 %v990
    %1482 = vmatpush.bf16.msra.mxu0 %v986
    %1483 = vmatpush.bf16.msra.mxu0 %v982
    %1484 = vmatpush.bf16.msra.mxu0 %v978
    %1485 = vmatpush.bf16.msra.mxu0 %v974
    %1486 = vmatpush.bf16.msra.mxu0 %v970
    %1487 = vmatpush.bf16.msra.mxu0 %v966
    %1488 = vmatpush.bf16.msra.mxu0 %v962
    %1489 = vmatmul.bf16.gmra.mxu0 %v66
    %v1490 = vpop.f32.mrf.mxu0
    %v1491 = vadd.f32 %v1478, %v1490
    %v1492 = vpop.f32.mrf.mxu0
    %1493 = vdwg.mxu0
    %1494 = vmatpush.bf16.msra.mxu0 %v1022
    %1495 = vmatpush.bf16.msra.mxu0 %v1018
    %1496 = vmatpush.bf16.msra.mxu0 %v1014
    %1497 = vmatpush.bf16.msra.mxu0 %v1010
    %1498 = vmatpush.bf16.msra.mxu0 %v1006
    %1499 = vmatpush.bf16.msra.mxu0 %v1002
    %1500 = vmatpush.bf16.msra.mxu0 %v998
    %1501 = vmatpush.bf16.msra.mxu0 %v994
    %1502 = vmatmul.bf16.gmra.mxu0 %v67
    %v1503 = vpop.f32.mrf.mxu0
    %v1504 = vadd.f32 %v1491, %v1503
    %v1505 = vpop.f32.mrf.mxu0
    %1506 = vdwg.mxu0
    %1507 = vmatpush.bf16.msra.mxu0 %v1054
    %1508 = vmatpush.bf16.msra.mxu0 %v1050
    %1509 = vmatpush.bf16.msra.mxu0 %v1046
    %1510 = vmatpush.bf16.msra.mxu0 %v1042
    %1511 = vmatpush.bf16.msra.mxu0 %v1038
    %1512 = vmatpush.bf16.msra.mxu0 %v1034
    %1513 = vmatpush.bf16.msra.mxu0 %v1030
    %1514 = vmatpush.bf16.msra.mxu0 %v1026
    %1515 = vmatmul.bf16.gmra.mxu0 %v68
    %v1516 = vpop.f32.mrf.mxu0
    %v1517 = vadd.f32 %v1504, %v1516
    %v1518 = vpop.f32.mrf.mxu0
    %1519 = vdwg.mxu0
    %1520 = vmatpush.bf16.msra.mxu0 0
    %1521 = vmatpush.bf16.msra.mxu0 0
    %1522 = vmatpush.bf16.msra.mxu0 0
    %1523 = vmatpush.bf16.msra.mxu0 0
    %1524 = vmatpush.bf16.msra.mxu0 0
    %1525 = vmatpush.bf16.msra.mxu0 0
    %1526 = vmatpush.bf16.msra.mxu0 0
    %1527 = vmatpush.bf16.msra.mxu0 %v1058
    %1528 = vmatmul.bf16.gmra.mxu0 %v1258
    %v1529 = vpop.f32.mrf.mxu0
    %v1530 = vadd.f32 %v1517, %v1529
    %v1531 = vpop.f32.mrf.mxu0
    %1532 = vdwg.mxu0
    %1533 = vmatpush.bf16.msra.mxu0 %v895
    %1534 = vmatpush.bf16.msra.mxu0 %v891
    %1535 = vmatpush.bf16.msra.mxu0 %v887
    %1536 = vmatpush.bf16.msra.mxu0 %v883
    %1537 = vmatpush.bf16.msra.mxu0 %v879
    %1538 = vmatpush.bf16.msra.mxu0 %v875
    %1539 = vmatpush.bf16.msra.mxu0 %v871
    %1540 = vmatpush.bf16.msra.mxu0 %v867
    %1541 = vmatmul.bf16.gmra.mxu0 %v63
    %v1542 = vpop.f32.mrf.mxu0
    %v1543 = vadd.f32 %v271, %v1542
    %v1544 = vpop.f32.mrf.mxu0
    %1545 = vdwg.mxu0
    %1546 = vmatpush.bf16.msra.mxu0 %v927
    %1547 = vmatpush.bf16.msra.mxu0 %v923
    %1548 = vmatpush.bf16.msra.mxu0 %v919
    %1549 = vmatpush.bf16.msra.mxu0 %v915
    %1550 = vmatpush.bf16.msra.mxu0 %v911
    %1551 = vmatpush.bf16.msra.mxu0 %v907
    %1552 = vmatpush.bf16.msra.mxu0 %v903
    %1553 = vmatpush.bf16.msra.mxu0 %v899
    %1554 = vmatmul.bf16.gmra.mxu0 %v64
    %v1555 = vpop.f32.mrf.mxu0
    %v1556 = vadd.f32 %v1543, %v1555
    %v1557 = vpop.f32.mrf.mxu0
    %1558 = vdwg.mxu0
    %1559 = vmatpush.bf16.msra.mxu0 %v959
    %1560 = vmatpush.bf16.msra.mxu0 %v955
    %1561 = vmatpush.bf16.msra.mxu0 %v951
    %1562 = vmatpush.bf16.msra.mxu0 %v947
    %1563 = vmatpush.bf16.msra.mxu0 %v943
    %1564 = vmatpush.bf16.msra.mxu0 %v939
    %1565 = vmatpush.bf16.msra.mxu0 %v935
    %1566 = vmatpush.bf16.msra.mxu0 %v931
    %1567 = vmatmul.bf16.gmra.mxu0 %v65
    %v1568 = vpop.f32.mrf.mxu0
    %v1569 = vadd.f32 %v1556, %v1568
    %v1570 = vpop.f32.mrf.mxu0
    %1571 = vdwg.mxu0
    %1572 = vmatpush.bf16.msra.mxu0 %v991
    %1573 = vmatpush.bf16.msra.mxu0 %v987
    %1574 = vmatpush.bf16.msra.mxu0 %v983
    %1575 = vmatpush.bf16.msra.mxu0 %v979
    %1576 = vmatpush.bf16.msra.mxu0 %v975
    %1577 = vmatpush.bf16.msra.mxu0 %v971
    %1578 = vmatpush.bf16.msra.mxu0 %v967
    %1579 = vmatpush.bf16.msra.mxu0 %v963
    %1580 = vmatmul.bf16.gmra.mxu0 %v66
    %v1581 = vpop.f32.mrf.mxu0
    %v1582 = vadd.f32 %v1569, %v1581
    %v1583 = vpop.f32.mrf.mxu0
    %1584 = vdwg.mxu0
    %1585 = vmatpush.bf16.msra.mxu0 %v1023
    %1586 = vmatpush.bf16.msra.mxu0 %v1019
    %1587 = vmatpush.bf16.msra.mxu0 %v1015
    %1588 = vmatpush.bf16.msra.mxu0 %v1011
    %1589 = vmatpush.bf16.msra.mxu0 %v1007
    %1590 = vmatpush.bf16.msra.mxu0 %v1003
    %1591 = vmatpush.bf16.msra.mxu0 %v999
    %1592 = vmatpush.bf16.msra.mxu0 %v995
    %1593 = vmatmul.bf16.gmra.mxu0 %v67
    %v1594 = vpop.f32.mrf.mxu0
    %v1595 = vadd.f32 %v1582, %v1594
    %v1596 = vpop.f32.mrf.mxu0
    %1597 = vdwg.mxu0
    %1598 = vmatpush.bf16.msra.mxu0 %v1055
    %1599 = vmatpush.bf16.msra.mxu0 %v1051
    %1600 = vmatpush.bf16.msra.mxu0 %v1047
    %1601 = vmatpush.bf16.msra.mxu0 %v1043
    %1602 = vmatpush.bf16.msra.mxu0 %v1039
    %1603 = vmatpush.bf16.msra.mxu0 %v1035
    %1604 = vmatpush.bf16.msra.mxu0 %v1031
    %1605 = vmatpush.bf16.msra.mxu0 %v1027
    %1606 = vmatmul.bf16.gmra.mxu0 %v68
    %v1607 = vpop.f32.mrf.mxu0
    %v1608 = vadd.f32 %v1595, %v1607
    %v1609 = vpop.f32.mrf.mxu0
    %1610 = vdwg.mxu0
    %1611 = vmatpush.bf16.msra.mxu0 0
    %1612 = vmatpush.bf16.msra.mxu0 0
    %1613 = vmatpush.bf16.msra.mxu0 0
    %1614 = vmatpush.bf16.msra.mxu0 0
    %1615 = vmatpush.bf16.msra.mxu0 0
    %1616 = vmatpush.bf16.msra.mxu0 0
    %1617 = vmatpush.bf16.msra.mxu0 0
    %1618 = vmatpush.bf16.msra.mxu0 %v1059
    %1619 = vmatmul.bf16.gmra.mxu0 %v1258
    %v1620 = vpop.f32.mrf.mxu0
    %v1621 = vadd.f32 %v1608, %v1620
    %v1622 = vpop.f32.mrf.mxu0
    %1623 = vdwg.mxu0
    %v1624 = vmax.f32 %v1348, 0.0
    %v1625 = vmax.f32 %v1439, 0.0
    %v1626 = vmax.f32 %v1530, 0.0
    %v1627 = vmax.f32 %v1621, 0.0
    %v1628 = vpack.c.bf16 %v1624, %v1624
    %v1629 = vpack.c.bf16 %v1625, %v1625
    %v1630 = vpack.c.bf16 %v1626, %v1626
    %v1631 = vpack.c.bf16 %v1627, %v1627
    %v1632 = vld [vmem:[%s3] sm:$0xff]
    %v1633 = vld [vmem:[%s3 + $0x8] sm:$0xff]
    %v1634 = vld [vmem:[%s3 + $0x10] sm:$0xff]
    %v1635 = vld [vmem:[%s3 + $0x18] sm:$0xff]
    %v1636 = vld [vmem:[%s3 + $0x20] sm:$0xff]
    %v1637 = vld [vmem:[%s3 + $0x28] sm:$0xff]
    %v1638 = vld [vmem:[%s3 + $0x30] sm:$0xff]
    %v1639 = vld [vmem:[%s3 + $0x38] sm:$0xff]
    %v1640 = vld [vmem:[%s3 + $0x40] sm:$0xff]
    %v1641 = vld [vmem:[%s3 + $0x48] sm:$0xff]
    %v1642 = vld [vmem:[%s3 + $0x50] sm:$0xff]
    %v1643 = vld [vmem:[%s3 + $0x58] sm:$0xff]
    %v1644 = vld [vmem:[%s3 + $0x60] sm:$0xff]
    %v1645 = vld [vmem:[%s3 + $0x68] sm:$0xff]
    %v1646 = vld [vmem:[%s3 + $0x70] sm:$0xff]
    %v1647 = vld [vmem:[%s3 + $0x78] sm:$0xff]
    %v1648 = vld [vmem:[%s3 + $0x80] sm:$0xff]
    %v1649 = vld [vmem:[%s3 + $0x88] sm:$0xff]
    %v1650 = vld [vmem:[%s3 + $0x90] sm:$0xff]
    %v1651 = vld [vmem:[%s3 + $0x98] sm:$0xff]
    %v1652 = vld [vmem:[%s3 + $0xa0] sm:$0xff]
    %v1653 = vld [vmem:[%s3 + $0xa8] sm:$0xff]
    %v1654 = vld [vmem:[%s3 + $0xb0] sm:$0xff]
    %v1655 = vld [vmem:[%s3 + $0xb8] sm:$0xff]
    %v1656 = vld [vmem:[%s3 + $0xc0] sm:$0xff]
    %v1657 = vld [vmem:[%s3 + $0xc8] sm:$0xff]
    %v1658 = vld [vmem:[%s3 + $0xd0] sm:$0xff]
    %v1659 = vld [vmem:[%s3 + $0xd8] sm:$0xff]
    %v1660 = vld [vmem:[%s3 + $0xe0] sm:$0xff]
    %v1661 = vld [vmem:[%s3 + $0xe8] sm:$0xff]
    %v1662 = vld [vmem:[%s3 + $0xf0] sm:$0xff]
    %v1663 = vld [vmem:[%s3 + $0xf8] sm:$0xff]
    %v1664 = vld [vmem:[%s3 + $0x100] sm:$0xff]
    %v1665 = vld [vmem:[%s3 + $0x108] sm:$0xff]
    %v1666 = vld [vmem:[%s3 + $0x110] sm:$0xff]
    %v1667 = vld [vmem:[%s3 + $0x118] sm:$0xff]
    %v1668 = vld [vmem:[%s3 + $0x120] sm:$0xff]
    %v1669 = vld [vmem:[%s3 + $0x128] sm:$0xff]
    %v1670 = vld [vmem:[%s3 + $0x130] sm:$0xff]
    %v1671 = vld [vmem:[%s3 + $0x138] sm:$0xff]
    %v1672 = vld [vmem:[%s3 + $0x140] sm:$0xff]
    %v1673 = vld [vmem:[%s3 + $0x148] sm:$0xff]
    %v1674 = vld [vmem:[%s3 + $0x150] sm:$0xff]
    %v1675 = vld [vmem:[%s3 + $0x158] sm:$0xff]
    %v1676 = vld [vmem:[%s3 + $0x160] sm:$0xff]
    %v1677 = vld [vmem:[%s3 + $0x168] sm:$0xff]
    %v1678 = vld [vmem:[%s3 + $0x170] sm:$0xff]
    %v1679 = vld [vmem:[%s3 + $0x178] sm:$0xff]
    %v1680 = vld [vmem:[%s3 + $0x180] sm:$0xff]
    %v1681 = vld [vmem:[%s3 + $0x188] sm:$0xff]
    %v1682 = vld [vmem:[%s3 + $0x190] sm:$0xff]
    %v1683 = vld [vmem:[%s3 + $0x198] sm:$0xff]
    %v1684 = vld [vmem:[%s3 + $0x1a0] sm:$0xff]
    %v1685 = vld [vmem:[%s3 + $0x1a8] sm:$0xff]
    %v1686 = vld [vmem:[%s3 + $0x1b0] sm:$0xff]
    %v1687 = vld [vmem:[%s3 + $0x1b8] sm:$0xff]
    %v1688 = vld [vmem:[%s3 + $0x1c0] sm:$0xff]
    %v1689 = vld [vmem:[%s3 + $0x1c8] sm:$0xff]
    %v1690 = vld [vmem:[%s3 + $0x1d0] sm:$0xff]
    %v1691 = vld [vmem:[%s3 + $0x1d8] sm:$0xff]
    %v1692 = vld [vmem:[%s3 + $0x1e0] sm:$0xff]
    %v1693 = vld [vmem:[%s3 + $0x1e8] sm:$0xff]
    %v1694 = vld [vmem:[%s3 + $0x1f0] sm:$0xff]
    %v1695 = vld [vmem:[%s3 + $0x1f8] sm:$0xff]
    %v1696 = vld [vmem:[%s4] sm:$0x3]
    %v1698 = vperm.slane %v1696, 0
    %v1699 = vperm.slane %v1696, 1
    %v1766 = vunpack.c.l.b16 %v1632
    %v1767 = vunpack.c.h.b16 %v1632
    %v1768 = vunpack.c.l.b16 %v1633
    %v1769 = vunpack.c.h.b16 %v1633
    %v1770 = vunpack.c.l.b16 %v1634
    %v1771 = vunpack.c.h.b16 %v1634
    %v1772 = vunpack.c.l.b16 %v1635
    %v1773 = vunpack.c.h.b16 %v1635
    %v1774 = vunpack.c.l.b16 %v1636
    %v1775 = vunpack.c.h.b16 %v1636
    %v1776 = vunpack.c.l.b16 %v1637
    %v1777 = vunpack.c.h.b16 %v1637
    %v1778 = vunpack.c.l.b16 %v1638
    %v1779 = vunpack.c.h.b16 %v1638
    %v1780 = vunpack.c.l.b16 %v1639
    %v1781 = vunpack.c.h.b16 %v1639
    %v1782 = vunpack.c.l.b16 %v1640
    %v1783 = vunpack.c.h.b16 %v1640
    %v1784 = vunpack.c.l.b16 %v1641
    %v1785 = vunpack.c.h.b16 %v1641
    %v1786 = vunpack.c.l.b16 %v1642
    %v1787 = vunpack.c.h.b16 %v1642
    %v1788 = vunpack.c.l.b16 %v1643
    %v1789 = vunpack.c.h.b16 %v1643
    %v1790 = vunpack.c.l.b16 %v1644
    %v1791 = vunpack.c.h.b16 %v1644
    %v1792 = vunpack.c.l.b16 %v1645
    %v1793 = vunpack.c.h.b16 %v1645
    %v1794 = vunpack.c.l.b16 %v1646
    %v1795 = vunpack.c.h.b16 %v1646
    %v1796 = vunpack.c.l.b16 %v1647
    %v1797 = vunpack.c.h.b16 %v1647
    %v1798 = vunpack.c.l.b16 %v1648
    %v1799 = vunpack.c.h.b16 %v1648
    %v1800 = vunpack.c.l.b16 %v1649
    %v1801 = vunpack.c.h.b16 %v1649
    %v1802 = vunpack.c.l.b16 %v1650
    %v1803 = vunpack.c.h.b16 %v1650
    %v1804 = vunpack.c.l.b16 %v1651
    %v1805 = vunpack.c.h.b16 %v1651
    %v1806 = vunpack.c.l.b16 %v1652
    %v1807 = vunpack.c.h.b16 %v1652
    %v1808 = vunpack.c.l.b16 %v1653
    %v1809 = vunpack.c.h.b16 %v1653
    %v1810 = vunpack.c.l.b16 %v1654
    %v1811 = vunpack.c.h.b16 %v1654
    %v1812 = vunpack.c.l.b16 %v1655
    %v1813 = vunpack.c.h.b16 %v1655
    %v1814 = vunpack.c.l.b16 %v1656
    %v1815 = vunpack.c.h.b16 %v1656
    %v1816 = vunpack.c.l.b16 %v1657
    %v1817 = vunpack.c.h.b16 %v1657
    %v1818 = vunpack.c.l.b16 %v1658
    %v1819 = vunpack.c.h.b16 %v1658
    %v1820 = vunpack.c.l.b16 %v1659
    %v1821 = vunpack.c.h.b16 %v1659
    %v1822 = vunpack.c.l.b16 %v1660
    %v1823 = vunpack.c.h.b16 %v1660
    %v1824 = vunpack.c.l.b16 %v1661
    %v1825 = vunpack.c.h.b16 %v1661
    %v1826 = vunpack.c.l.b16 %v1662
    %v1827 = vunpack.c.h.b16 %v1662
    %v1828 = vunpack.c.l.b16 %v1663
    %v1829 = vunpack.c.h.b16 %v1663
    %v1830 = vunpack.c.l.b16 %v1664
    %v1831 = vunpack.c.h.b16 %v1664
    %v1832 = vunpack.c.l.b16 %v1665
    %v1833 = vunpack.c.h.b16 %v1665
    %v1834 = vunpack.c.l.b16 %v1666
    %v1835 = vunpack.c.h.b16 %v1666
    %v1836 = vunpack.c.l.b16 %v1667
    %v1837 = vunpack.c.h.b16 %v1667
    %v1838 = vunpack.c.l.b16 %v1668
    %v1839 = vunpack.c.h.b16 %v1668
    %v1840 = vunpack.c.l.b16 %v1669
    %v1841 = vunpack.c.h.b16 %v1669
    %v1842 = vunpack.c.l.b16 %v1670
    %v1843 = vunpack.c.h.b16 %v1670
    %v1844 = vunpack.c.l.b16 %v1671
    %v1845 = vunpack.c.h.b16 %v1671
    %v1846 = vunpack.c.l.b16 %v1672
    %v1847 = vunpack.c.h.b16 %v1672
    %v1848 = vunpack.c.l.b16 %v1673
    %v1849 = vunpack.c.h.b16 %v1673
    %v1850 = vunpack.c.l.b16 %v1674
    %v1851 = vunpack.c.h.b16 %v1674
    %v1852 = vunpack.c.l.b16 %v1675
    %v1853 = vunpack.c.h.b16 %v1675
    %v1854 = vunpack.c.l.b16 %v1676
    %v1855 = vunpack.c.h.b16 %v1676
    %v1856 = vunpack.c.l.b16 %v1677
    %v1857 = vunpack.c.h.b16 %v1677
    %v1858 = vunpack.c.l.b16 %v1678
    %v1859 = vunpack.c.h.b16 %v1678
    %v1860 = vunpack.c.l.b16 %v1679
    %v1861 = vunpack.c.h.b16 %v1679
    %v1862 = vunpack.c.l.b16 %v1680
    %v1863 = vunpack.c.h.b16 %v1680
    %v1864 = vunpack.c.l.b16 %v1681
    %v1865 = vunpack.c.h.b16 %v1681
    %v1866 = vunpack.c.l.b16 %v1682
    %v1867 = vunpack.c.h.b16 %v1682
    %v1868 = vunpack.c.l.b16 %v1683
    %v1869 = vunpack.c.h.b16 %v1683
    %v1870 = vunpack.c.l.b16 %v1684
    %v1871 = vunpack.c.h.b16 %v1684
    %v1872 = vunpack.c.l.b16 %v1685
    %v1873 = vunpack.c.h.b16 %v1685
    %v1874 = vunpack.c.l.b16 %v1686
    %v1875 = vunpack.c.h.b16 %v1686
    %v1876 = vunpack.c.l.b16 %v1687
    %v1877 = vunpack.c.h.b16 %v1687
    %v1878 = vunpack.c.l.b16 %v1688
    %v1879 = vunpack.c.h.b16 %v1688
    %v1880 = vunpack.c.l.b16 %v1689
    %v1881 = vunpack.c.h.b16 %v1689
    %v1882 = vunpack.c.l.b16 %v1690
    %v1883 = vunpack.c.h.b16 %v1690
    %v1884 = vunpack.c.l.b16 %v1691
    %v1885 = vunpack.c.h.b16 %v1691
    %v1886 = vunpack.c.l.b16 %v1692
    %v1887 = vunpack.c.h.b16 %v1692
    %v1888 = vunpack.c.l.b16 %v1693
    %v1889 = vunpack.c.h.b16 %v1693
    %v1890 = vunpack.c.l.b16 %v1694
    %v1891 = vunpack.c.h.b16 %v1694
    %v1892 = vunpack.c.l.b16 %v1695
    %v1893 = vunpack.c.h.b16 %v1695
    %v1894 = vpack.c.b16 %v1768, %v1766
    %v1895 = vpack.c.b16 %v1769, %v1767
    %v1896 = vpack.c.b16 %v1772, %v1770
    %v1897 = vpack.c.b16 %v1773, %v1771
    %v1898 = vpack.c.b16 %v1776, %v1774
    %v1899 = vpack.c.b16 %v1777, %v1775
    %v1900 = vpack.c.b16 %v1780, %v1778
    %v1901 = vpack.c.b16 %v1781, %v1779
    %v1902 = vpack.c.b16 %v1784, %v1782
    %v1903 = vpack.c.b16 %v1785, %v1783
    %v1904 = vpack.c.b16 %v1788, %v1786
    %v1905 = vpack.c.b16 %v1789, %v1787
    %v1906 = vpack.c.b16 %v1792, %v1790
    %v1907 = vpack.c.b16 %v1793, %v1791
    %v1908 = vpack.c.b16 %v1796, %v1794
    %v1909 = vpack.c.b16 %v1797, %v1795
    %v1910 = vpack.c.b16 %v1800, %v1798
    %v1911 = vpack.c.b16 %v1801, %v1799
    %v1912 = vpack.c.b16 %v1804, %v1802
    %v1913 = vpack.c.b16 %v1805, %v1803
    %v1914 = vpack.c.b16 %v1808, %v1806
    %v1915 = vpack.c.b16 %v1809, %v1807
    %v1916 = vpack.c.b16 %v1812, %v1810
    %v1917 = vpack.c.b16 %v1813, %v1811
    %v1918 = vpack.c.b16 %v1816, %v1814
    %v1919 = vpack.c.b16 %v1817, %v1815
    %v1920 = vpack.c.b16 %v1820, %v1818
    %v1921 = vpack.c.b16 %v1821, %v1819
    %v1922 = vpack.c.b16 %v1824, %v1822
    %v1923 = vpack.c.b16 %v1825, %v1823
    %v1924 = vpack.c.b16 %v1828, %v1826
    %v1925 = vpack.c.b16 %v1829, %v1827
    %v1926 = vpack.c.b16 %v1832, %v1830
    %v1927 = vpack.c.b16 %v1833, %v1831
    %v1928 = vpack.c.b16 %v1836, %v1834
    %v1929 = vpack.c.b16 %v1837, %v1835
    %v1930 = vpack.c.b16 %v1840, %v1838
    %v1931 = vpack.c.b16 %v1841, %v1839
    %v1932 = vpack.c.b16 %v1844, %v1842
    %v1933 = vpack.c.b16 %v1845, %v1843
    %v1934 = vpack.c.b16 %v1848, %v1846
    %v1935 = vpack.c.b16 %v1849, %v1847
    %v1936 = vpack.c.b16 %v1852, %v1850
    %v1937 = vpack.c.b16 %v1853, %v1851
    %v1938 = vpack.c.b16 %v1856, %v1854
    %v1939 = vpack.c.b16 %v1857, %v1855
    %v1940 = vpack.c.b16 %v1860, %v1858
    %v1941 = vpack.c.b16 %v1861, %v1859
    %v1942 = vpack.c.b16 %v1864, %v1862
    %v1943 = vpack.c.b16 %v1865, %v1863
    %v1944 = vpack.c.b16 %v1868, %v1866
    %v1945 = vpack.c.b16 %v1869, %v1867
    %v1946 = vpack.c.b16 %v1872, %v1870
    %v1947 = vpack.c.b16 %v1873, %v1871
    %v1948 = vpack.c.b16 %v1876, %v1874
    %v1949 = vpack.c.b16 %v1877, %v1875
    %v1950 = vpack.c.b16 %v1880, %v1878
    %v1951 = vpack.c.b16 %v1881, %v1879
    %v1952 = vpack.c.b16 %v1884, %v1882
    %v1953 = vpack.c.b16 %v1885, %v1883
    %v1954 = vpack.c.b16 %v1888, %v1886
    %v1955 = vpack.c.b16 %v1889, %v1887
    %v1956 = vpack.c.b16 %v1892, %v1890
    %v1957 = vpack.c.b16 %v1893, %v1891
    %2022 = vmatpush.bf16.msra.mxu0 %v1908
    %2023 = vmatpush.bf16.msra.mxu0 %v1906
    %2024 = vmatpush.bf16.msra.mxu0 %v1904
    %2025 = vmatpush.bf16.msra.mxu0 %v1902
    %2026 = vmatpush.bf16.msra.mxu0 %v1900
    %2027 = vmatpush.bf16.msra.mxu0 %v1898
    %2028 = vmatpush.bf16.msra.mxu0 %v1896
    %2029 = vmatpush.bf16.msra.mxu0 %v1894
    %2030 = vmatmul.bf16.gmra.mxu0 %v1628
    %v2031 = vpop.f32.mrf.mxu0
    %v2032 = vadd.f32 %v1698, %v2031
    %v2033 = vpop.f32.mrf.mxu0
    %2034 = vdwg.mxu0
    %2035 = vmatpush.bf16.msra.mxu0 %v1924
    %2036 = vmatpush.bf16.msra.mxu0 %v1922
    %2037 = vmatpush.bf16.msra.mxu0 %v1920
    %2038 = vmatpush.bf16.msra.mxu0 %v1918
    %2039 = vmatpush.bf16.msra.mxu0 %v1916
    %2040 = vmatpush.bf16.msra.mxu0 %v1914
    %2041 = vmatpush.bf16.msra.mxu0 %v1912
    %2042 = vmatpush.bf16.msra.mxu0 %v1910
    %2043 = vmatmul.bf16.gmra.mxu0 %v1629
    %v2044 = vpop.f32.mrf.mxu0
    %v2045 = vadd.f32 %v2032, %v2044
    %v2046 = vpop.f32.mrf.mxu0
    %2047 = vdwg.mxu0
    %2048 = vmatpush.bf16.msra.mxu0 %v1940
    %2049 = vmatpush.bf16.msra.mxu0 %v1938
    %2050 = vmatpush.bf16.msra.mxu0 %v1936
    %2051 = vmatpush.bf16.msra.mxu0 %v1934
    %2052 = vmatpush.bf16.msra.mxu0 %v1932
    %2053 = vmatpush.bf16.msra.mxu0 %v1930
    %2054 = vmatpush.bf16.msra.mxu0 %v1928
    %2055 = vmatpush.bf16.msra.mxu0 %v1926
    %2056 = vmatmul.bf16.gmra.mxu0 %v1630
    %v2057 = vpop.f32.mrf.mxu0
    %v2058 = vadd.f32 %v2045, %v2057
    %v2059 = vpop.f32.mrf.mxu0
    %2060 = vdwg.mxu0
    %2061 = vmatpush.bf16.msra.mxu0 %v1956
    %2062 = vmatpush.bf16.msra.mxu0 %v1954
    %2063 = vmatpush.bf16.msra.mxu0 %v1952
    %2064 = vmatpush.bf16.msra.mxu0 %v1950
    %2065 = vmatpush.bf16.msra.mxu0 %v1948
    %2066 = vmatpush.bf16.msra.mxu0 %v1946
    %2067 = vmatpush.bf16.msra.mxu0 %v1944
    %2068 = vmatpush.bf16.msra.mxu0 %v1942
    %2069 = vmatmul.bf16.gmra.mxu0 %v1631
    %v2070 = vpop.f32.mrf.mxu0
    %v2071 = vadd.f32 %v2058, %v2070
    %v2072 = vpop.f32.mrf.mxu0
    %2073 = vdwg.mxu0
    %2074 = vmatpush.bf16.msra.mxu0 %v1909
    %2075 = vmatpush.bf16.msra.mxu0 %v1907
    %2076 = vmatpush.bf16.msra.mxu0 %v1905
    %2077 = vmatpush.bf16.msra.mxu0 %v1903
    %2078 = vmatpush.bf16.msra.mxu0 %v1901
    %2079 = vmatpush.bf16.msra.mxu0 %v1899
    %2080 = vmatpush.bf16.msra.mxu0 %v1897
    %2081 = vmatpush.bf16.msra.mxu0 %v1895
    %2082 = vmatmul.bf16.gmra.mxu0 %v1628
    %v2083 = vpop.f32.mrf.mxu0
    %v2084 = vadd.f32 %v1699, %v2083
    %v2085 = vpop.f32.mrf.mxu0
    %2086 = vdwg.mxu0
    %2087 = vmatpush.bf16.msra.mxu0 %v1925
    %2088 = vmatpush.bf16.msra.mxu0 %v1923
    %2089 = vmatpush.bf16.msra.mxu0 %v1921
    %2090 = vmatpush.bf16.msra.mxu0 %v1919
    %2091 = vmatpush.bf16.msra.mxu0 %v1917
    %2092 = vmatpush.bf16.msra.mxu0 %v1915
    %2093 = vmatpush.bf16.msra.mxu0 %v1913
    %2094 = vmatpush.bf16.msra.mxu0 %v1911
    %2095 = vmatmul.bf16.gmra.mxu0 %v1629
    %v2096 = vpop.f32.mrf.mxu0
    %v2097 = vadd.f32 %v2084, %v2096
    %v2098 = vpop.f32.mrf.mxu0
    %2099 = vdwg.mxu0
    %2100 = vmatpush.bf16.msra.mxu0 %v1941
    %2101 = vmatpush.bf16.msra.mxu0 %v1939
    %2102 = vmatpush.bf16.msra.mxu0 %v1937
    %2103 = vmatpush.bf16.msra.mxu0 %v1935
    %2104 = vmatpush.bf16.msra.mxu0 %v1933
    %2105 = vmatpush.bf16.msra.mxu0 %v1931
    %2106 = vmatpush.bf16.msra.mxu0 %v1929
    %2107 = vmatpush.bf16.msra.mxu0 %v1927
    %2108 = vmatmul.bf16.gmra.mxu0 %v1630
    %v2109 = vpop.f32.mrf.mxu0
    %v2110 = vadd.f32 %v2097, %v2109
    %v2111 = vpop.f32.mrf.mxu0
    %2112 = vdwg.mxu0
    %2113 = vmatpush.bf16.msra.mxu0 %v1957
    %2114 = vmatpush.bf16.msra.mxu0 %v1955
    %2115 = vmatpush.bf16.msra.mxu0 %v1953
    %2116 = vmatpush.bf16.msra.mxu0 %v1951
    %2117 = vmatpush.bf16.msra.mxu0 %v1949
    %2118 = vmatpush.bf16.msra.mxu0 %v1947
    %2119 = vmatpush.bf16.msra.mxu0 %v1945
    %2120 = vmatpush.bf16.msra.mxu0 %v1943
    %2121 = vmatmul.bf16.gmra.mxu0 %v1631
    %v2122 = vpop.f32.mrf.mxu0
    %v2123 = vadd.f32 %v2110, %v2122
    %v2124 = vpop.f32.mrf.mxu0
    %2125 = vdwg.mxu0
    %v2126 = vmax.f32 %v2071, 0.0
    %v2127 = vmax.f32 %v2123, 0.0
    %v2128 = vpack.c.bf16 %v2126, %v2126
    %v2129 = vpack.c.bf16 %v2127, %v2127
    %v2130 = vld [vmem:[%s5] sm:$0xf]
    %v2131 = vld [vmem:[%s5 + $0x4] sm:$0xf]
    %v2132 = vld [vmem:[%s5 + $0x8] sm:$0xf]
    %v2133 = vld [vmem:[%s5 + $0xc] sm:$0xf]
    %v2134 = vld [vmem:[%s5 + $0x10] sm:$0xf]
    %v2135 = vld [vmem:[%s5 + $0x14] sm:$0xf]
    %v2136 = vld [vmem:[%s5 + $0x18] sm:$0xf]
    %v2137 = vld [vmem:[%s5 + $0x1c] sm:$0xf]
    %v2138 = vld [vmem:[%s5 + $0x20] sm:$0xf]
    %v2139 = vld [vmem:[%s5 + $0x24] sm:$0xf]
    %v2140 = vld [vmem:[%s5 + $0x28] sm:$0xf]
    %v2141 = vld [vmem:[%s5 + $0x2c] sm:$0xf]
    %v2142 = vld [vmem:[%s5 + $0x30] sm:$0xf]
    %v2143 = vld [vmem:[%s5 + $0x34] sm:$0xf]
    %v2144 = vld [vmem:[%s5 + $0x38] sm:$0xf]
    %v2145 = vld [vmem:[%s5 + $0x3c] sm:$0xf]
    %v2146 = vld [vmem:[%s5 + $0x40] sm:$0xf]
    %v2147 = vld [vmem:[%s5 + $0x44] sm:$0xf]
    %v2148 = vld [vmem:[%s5 + $0x48] sm:$0xf]
    %v2149 = vld [vmem:[%s5 + $0x4c] sm:$0xf]
    %v2150 = vld [vmem:[%s5 + $0x50] sm:$0xf]
    %v2151 = vld [vmem:[%s5 + $0x54] sm:$0xf]
    %v2152 = vld [vmem:[%s5 + $0x58] sm:$0xf]
    %v2153 = vld [vmem:[%s5 + $0x5c] sm:$0xf]
    %v2154 = vld [vmem:[%s5 + $0x60] sm:$0xf]
    %v2155 = vld [vmem:[%s5 + $0x64] sm:$0xf]
    %v2156 = vld [vmem:[%s5 + $0x68] sm:$0xf]
    %v2157 = vld [vmem:[%s5 + $0x6c] sm:$0xf]
    %v2158 = vld [vmem:[%s5 + $0x70] sm:$0xf]
    %v2159 = vld [vmem:[%s5 + $0x74] sm:$0xf]
    %v2160 = vld [vmem:[%s5 + $0x78] sm:$0xf]
    %v2161 = vld [vmem:[%s5 + $0x7c] sm:$0xf]
    %v2162 = vld [vmem:[%s6] sm:$0x1]
    %v2164 = vperm.slane %v2162, 0
    %v2198 = vunpack.c.l.b16 %v2130
    %v2199 = vunpack.c.l.b16 %v2131
    %v2200 = vunpack.c.l.b16 %v2132
    %v2201 = vunpack.c.l.b16 %v2133
    %v2202 = vunpack.c.l.b16 %v2134
    %v2203 = vunpack.c.l.b16 %v2135
    %v2204 = vunpack.c.l.b16 %v2136
    %v2205 = vunpack.c.l.b16 %v2137
    %v2206 = vunpack.c.l.b16 %v2138
    %v2207 = vunpack.c.l.b16 %v2139
    %v2208 = vunpack.c.l.b16 %v2140
    %v2209 = vunpack.c.l.b16 %v2141
    %v2210 = vunpack.c.l.b16 %v2142
    %v2211 = vunpack.c.l.b16 %v2143
    %v2212 = vunpack.c.l.b16 %v2144
    %v2213 = vunpack.c.l.b16 %v2145
    %v2214 = vunpack.c.l.b16 %v2146
    %v2215 = vunpack.c.l.b16 %v2147
    %v2216 = vunpack.c.l.b16 %v2148
    %v2217 = vunpack.c.l.b16 %v2149
    %v2218 = vunpack.c.l.b16 %v2150
    %v2219 = vunpack.c.l.b16 %v2151
    %v2220 = vunpack.c.l.b16 %v2152
    %v2221 = vunpack.c.l.b16 %v2153
    %v2222 = vunpack.c.l.b16 %v2154
    %v2223 = vunpack.c.l.b16 %v2155
    %v2224 = vunpack.c.l.b16 %v2156
    %v2225 = vunpack.c.l.b16 %v2157
    %v2226 = vunpack.c.l.b16 %v2158
    %v2227 = vunpack.c.l.b16 %v2159
    %v2228 = vunpack.c.l.b16 %v2160
    %v2229 = vunpack.c.l.b16 %v2161
    %v2230 = vpack.c.b16 %v2199, %v2198
    %v2231 = vpack.c.b16 %v2201, %v2200
    %v2232 = vpack.c.b16 %v2203, %v2202
    %v2233 = vpack.c.b16 %v2205, %v2204
    %v2234 = vpack.c.b16 %v2207, %v2206
    %v2235 = vpack.c.b16 %v2209, %v2208
    %v2236 = vpack.c.b16 %v2211, %v2210
    %v2237 = vpack.c.b16 %v2213, %v2212
    %v2238 = vpack.c.b16 %v2215, %v2214
    %v2239 = vpack.c.b16 %v2217, %v2216
    %v2240 = vpack.c.b16 %v2219, %v2218
    %v2241 = vpack.c.b16 %v2221, %v2220
    %v2242 = vpack.c.b16 %v2223, %v2222
    %v2243 = vpack.c.b16 %v2225, %v2224
    %v2244 = vpack.c.b16 %v2227, %v2226
    %v2245 = vpack.c.b16 %v2229, %v2228
    %2262 = vmatpush.bf16.msra.mxu0 %v2237
    %2263 = vmatpush.bf16.msra.mxu0 %v2236
    %2264 = vmatpush.bf16.msra.mxu0 %v2235
    %2265 = vmatpush.bf16.msra.mxu0 %v2234
    %2266 = vmatpush.bf16.msra.mxu0 %v2233
    %2267 = vmatpush.bf16.msra.mxu0 %v2232
    %2268 = vmatpush.bf16.msra.mxu0 %v2231
    %2269 = vmatpush.bf16.msra.mxu0 %v2230
    %2270 = vmatmul.bf16.gmra.mxu0 %v2128
    %v2271 = vpop.f32.mrf.mxu0
    %v2272 = vadd.f32 %v2164, %v2271
    %v2273 = vpop.f32.mrf.mxu0
    %2274 = vdwg.mxu0
    %2275 = vmatpush.bf16.msra.mxu0 %v2245
    %2276 = vmatpush.bf16.msra.mxu0 %v2244
    %2277 = vmatpush.bf16.msra.mxu0 %v2243
    %2278 = vmatpush.bf16.msra.mxu0 %v2242
    %2279 = vmatpush.bf16.msra.mxu0 %v2241
    %2280 = vmatpush.bf16.msra.mxu0 %v2240
    %2281 = vmatpush.bf16.msra.mxu0 %v2239
    %2282 = vmatpush.bf16.msra.mxu0 %v2238
    %2283 = vmatmul.bf16.gmra.mxu0 %v2129
    %v2284 = vpop.f32.mrf.mxu0
    %v2285 = vadd.f32 %v2272, %v2284
    %v2286 = vpop.f32.mrf.mxu0
    %2287 = vdwg.mxu0
    %v2288 = vmax.f32 %v2285, 0.0
    %v2289 = vpack.c.bf16 %v2288, %v2288
    %v2290 = vld [vmem:[%s7] sm:$0xf]
    %v2291 = vld [vmem:[%s7 + $0x4] sm:$0xf]
    %v2292 = vld [vmem:[%s7 + $0x8] sm:$0xf]
    %v2293 = vld [vmem:[%s7 + $0xc] sm:$0xf]
    %v2294 = vld [vmem:[%s7 + $0x10] sm:$0xf]
    %v2295 = vld [vmem:[%s7 + $0x14] sm:$0xf]
    %v2296 = vld [vmem:[%s7 + $0x18] sm:$0xf]
    %v2297 = vld [vmem:[%s7 + $0x1c] sm:$0xf]
    %v2298 = vld [vmem:[%s7 + $0x20] sm:$0xf]
    %v2299 = vld [vmem:[%s7 + $0x24] sm:$0xf]
    %v2300 = vld [vmem:[%s7 + $0x28] sm:$0xf]
    %v2301 = vld [vmem:[%s7 + $0x2c] sm:$0xf]
    %v2302 = vld [vmem:[%s7 + $0x30] sm:$0xf]
    %v2303 = vld [vmem:[%s7 + $0x34] sm:$0xf]
    %v2304 = vld [vmem:[%s7 + $0x38] sm:$0xf]
    %v2305 = vld [vmem:[%s7 + $0x3c] sm:$0xf]
    %v2306 = vld [vmem:[%s8] sm:$0x1]
    %v2308 = vperm.slane %v2306, 0
    %v2326 = vunpack.c.l.b16 %v2290
    %v2327 = vunpack.c.l.b16 %v2291
    %v2328 = vunpack.c.l.b16 %v2292
    %v2329 = vunpack.c.l.b16 %v2293
    %v2330 = vunpack.c.l.b16 %v2294
    %v2331 = vunpack.c.l.b16 %v2295
    %v2332 = vunpack.c.l.b16 %v2296
    %v2333 = vunpack.c.l.b16 %v2297
    %v2334 = vunpack.c.l.b16 %v2298
    %v2335 = vunpack.c.l.b16 %v2299
    %v2336 = vunpack.c.l.b16 %v2300
    %v2337 = vunpack.c.l.b16 %v2301
    %v2338 = vunpack.c.l.b16 %v2302
    %v2339 = vunpack.c.l.b16 %v2303
    %v2340 = vunpack.c.l.b16 %v2304
    %v2341 = vunpack.c.l.b16 %v2305
    %v2342 = vpack.c.b16 %v2327, %v2326
    %v2343 = vpack.c.b16 %v2329, %v2328
    %v2344 = vpack.c.b16 %v2331, %v2330
    %v2345 = vpack.c.b16 %v2333, %v2332
    %v2346 = vpack.c.b16 %v2335, %v2334
    %v2347 = vpack.c.b16 %v2337, %v2336
    %v2348 = vpack.c.b16 %v2339, %v2338
    %v2349 = vpack.c.b16 %v2341, %v2340
    %2358 = vmatpush.bf16.msra.mxu0 %v2349
    %2359 = vmatpush.bf16.msra.mxu0 %v2348
    %2360 = vmatpush.bf16.msra.mxu0 %v2347
    %2361 = vmatpush.bf16.msra.mxu0 %v2346
    %2362 = vmatpush.bf16.msra.mxu0 %v2345
    %2363 = vmatpush.bf16.msra.mxu0 %v2344
    %2364 = vmatpush.bf16.msra.mxu0 %v2343
    %2365 = vmatpush.bf16.msra.mxu0 %v2342
    %2366 = vmatmul.bf16.gmra.mxu0 %v2289
    %v2367 = vpop.f32.mrf.mxu0
    %v2368 = vadd.f32 %v2308, %v2367
    %v2369 = vpop.f32.mrf.mxu0
    %2370 = vdwg.mxu0
    %v2371 = vmax.f32 %v2368, 0.0
    %v2372 = vpack.c.bf16 %v2371, %v2371
    %v2373 = vld [vmem:[%s9] sm:$0xf]
    %v2374 = vld [vmem:[%s9 + $0x4] sm:$0xf]
    %v2375 = vld [vmem:[%s9 + $0x8] sm:$0xf]
    %v2376 = vld [vmem:[%s9 + $0xc] sm:$0xf]
    %v2377 = vld [vmem:[%s9 + $0x10] sm:$0xf]
    %v2378 = vld [vmem:[%s9 + $0x14] sm:$0xf]
    %v2379 = vld [vmem:[%s9 + $0x18] sm:$0xf]
    %v2380 = vld [vmem:[%s9 + $0x1c] sm:$0xf]
    %v2381 = vld [vmem:[%s9 + $0x20] sm:$0xf]
    %v2382 = vld [vmem:[%s9 + $0x24] sm:$0xf]
    %v2383 = vld [vmem:[%s9 + $0x28] sm:$0xf]
    %v2384 = vld [vmem:[%s9 + $0x2c] sm:$0xf]
    %v2385 = vld [vmem:[%s9 + $0x30] sm:$0xf]
    %v2386 = vld [vmem:[%s9 + $0x34] sm:$0xf]
    %v2387 = vld [vmem:[%s9 + $0x38] sm:$0xf]
    %v2388 = vld [vmem:[%s9 + $0x3c] sm:$0xf]
    %v2389 = vld [vmem:[%s10] sm:$0x1]
    %v2391 = vperm.slane %v2389, 0
    %v2409 = vunpack.c.l.b16 %v2373
    %v2410 = vunpack.c.l.b16 %v2374
    %v2411 = vunpack.c.l.b16 %v2375
    %v2412 = vunpack.c.l.b16 %v2376
    %v2413 = vunpack.c.l.b16 %v2377
    %v2414 = vunpack.c.l.b16 %v2378
    %v2415 = vunpack.c.l.b16 %v2379
    %v2416 = vunpack.c.l.b16 %v2380
    %v2417 = vunpack.c.l.b16 %v2381
    %v2418 = vunpack.c.l.b16 %v2382
    %v2419 = vunpack.c.l.b16 %v2383
    %v2420 = vunpack.c.l.b16 %v2384
    %v2421 = vunpack.c.l.b16 %v2385
    %v2422 = vunpack.c.l.b16 %v2386
    %v2423 = vunpack.c.l.b16 %v2387
    %v2424 = vunpack.c.l.b16 %v2388
    %v2425 = vpack.c.b16 %v2410, %v2409
    %v2426 = vpack.c.b16 %v2412, %v2411
    %v2427 = vpack.c.b16 %v2414, %v2413
    %v2428 = vpack.c.b16 %v2416, %v2415
    %v2429 = vpack.c.b16 %v2418, %v2417
    %v2430 = vpack.c.b16 %v2420, %v2419
    %v2431 = vpack.c.b16 %v2422, %v2421
    %v2432 = vpack.c.b16 %v2424, %v2423
    %2441 = vmatpush.bf16.msra.mxu0 %v2432
    %2442 = vmatpush.bf16.msra.mxu0 %v2431
    %2443 = vmatpush.bf16.msra.mxu0 %v2430
    %2444 = vmatpush.bf16.msra.mxu0 %v2429
    %2445 = vmatpush.bf16.msra.mxu0 %v2428
    %2446 = vmatpush.bf16.msra.mxu0 %v2427
    %2447 = vmatpush.bf16.msra.mxu0 %v2426
    %2448 = vmatpush.bf16.msra.mxu0 %v2425
    %2449 = vmatmul.bf16.gmra.mxu0 %v2372
    %v2450 = vpop.f32.mrf.mxu0
    %v2451 = vadd.f32 %v2391, %v2450
    %v2452 = vpop.f32.mrf.mxu0
    %2453 = vdwg.mxu0
    %2454 = vst [vmem:[#allocation5] sm:$0xff] %v2451
    // Predicated region
    $region50: #{net_forward.1} parent=1 // pred_check
      _
    $region51: #{net_forward.1} parent=1 // pred_check_branch
      %2456 = sbr.rel (0) target = $region53
    $region52: #{net_forward.1} parent=1 // pred_region
      %2458 = vsyncadd [#allocation4], 0
      %s2460 = sshll.u32 [#allocation5], 4
      %s2461 = int_to_ptr.vmem [resolvable:$true] %s2460
      %s2462 = sshll.u32 %s11, 4
      %s2463 = int_to_ptr.hbm [resolvable:$true] %s2462
      %2465 = dma.vmem_to_hbm [thread:$0]  %s2461, 128, %s2463, [#allocation4]
    $region53: #{net_forward.1} parent=1 // pred_fallthru
      _
    // Predicated region
    $region54: #{net_forward.1} parent=1 // pred_check
      _
    $region55: #{net_forward.1} parent=1 // pred_check_branch
      %2467 = sbr.rel (0) target = $region57
    $region56: #{net_forward.1} parent=1 // pred_region
      %2469 = dma.done [#allocation4], 128
    $region57: #{net_forward.1} parent=1 // pred_fallthru
      _
    %2470 = vsyncpa [#allocation3], 1
    %2471 = vsyncpa [#allocation4], 1

</llo_original>
